<compile_context>
chip_gen: v6e
topology: v6e:2x2x1
jax: 0.10.0
libtpu: 0.0.40
codegen_flags: <defaults>
</compile_context>

<pallas_src>
import jax
import jax.numpy as jnp
from jax.experimental import pallas as pl
from jax.experimental.pallas import tpu as pltpu

HIDDEN = 768
SUBLANE = 8  # f32 sublane count; batch is padded to a multiple of this


def _head_kernel(h_ref, wp_ref, bp_ref, mask_ref, wc_ref, bc_ref, out_ref):
    # BertPooler: tanh(h_cls @ W_pool + b_pool)  (bf16 on the MXU, f32 acc)
    pooled = jnp.tanh(
        jnp.dot(h_ref[...], wp_ref[...], preferred_element_type=jnp.float32)
        + bp_ref[...]
    )
    # ReLU + inverted dropout (mask already pre-scaled by 1/keep_prob)
    act = jnp.maximum(pooled, 0.0) * mask_ref[...]
    # Classifier head: act @ W_cls + b_cls
    logits = (
        jnp.dot(act.astype(jnp.bfloat16), wc_ref[...],
                preferred_element_type=jnp.float32)
        + bc_ref[...]
    )
    # Softmax over dim=1 (last / lane axis), exact f32 normalization.
    m = jnp.max(logits, axis=1, keepdims=True)
    e = jnp.exp(logits - m)
    out_ref[...] = e / jnp.sum(e, axis=1, keepdims=True)


def bert_head_forward(h_cls, w_pool, b_pool, w_cls, b_cls, *,
                      drop_out=0.1, rng_key=None):
    """h_cls: [B, 768] f32 ([CLS] hidden state). Returns [B, O] probabilities."""
    B, H = h_cls.shape
    O = w_cls.shape[1]
    keep_prob = 1.0 - float(drop_out)

    # Training-mode inverted dropout mask, generated host-side (no hardware
    # PRNG in-kernel -> portable to interpret mode). Pass a fresh rng_key per
    # call for true per-forward dropout draws.
    if keep_prob < 1.0:
        if rng_key is None:
            rng_key = jax.random.PRNGKey(0)
        keep = jax.random.bernoulli(rng_key, p=keep_prob, shape=(B, H))
        mask = keep.astype(jnp.float32) * jnp.float32(1.0 / keep_prob)
    else:
        mask = jnp.ones((B, H), dtype=jnp.float32)

    # Pad batch to a multiple of 8 sublanes: fills vregs, unmasked output
    # stores, and amortizes the (dominant) weight DMA over more rows for free.
    Bp = max(SUBLANE, ((B + SUBLANE - 1) // SUBLANE) * SUBLANE)
    pad = Bp - B
    h_p = jnp.pad(h_cls, ((0, pad), (0, 0)))
    mask_p = jnp.pad(mask, ((0, pad), (0, 0)))

    # bf16 activations/weights (wrapper-side cast): halves HBM traffic and is
    # the MXU-native dtype; f32 accumulation keeps numerics reasonable.
    h_bf16 = h_p.astype(jnp.bfloat16)
    wp_bf16 = w_pool.astype(jnp.bfloat16)
    wc_bf16 = w_cls.astype(jnp.bfloat16)
    bp2 = b_pool.reshape(1, H).astype(jnp.float32)
    bc2 = b_cls.reshape(1, O).astype(jnp.float32)

    # Single block, no grid: whole working set lives in VMEM for one shot.
    vmem = pl.BlockSpec(memory_space=pltpu.MemorySpace.VMEM)
    probs_p = pl.pallas_call(
        _head_kernel,
        out_shape=jax.ShapeDtypeStruct((Bp, O), jnp.float32),
        in_specs=[vmem] * 6,
        out_specs=vmem,
    )(h_bf16, wp_bf16, bp2, mask_p, wc_bf16, bc2)

    return probs_p[:B]


if __name__ == "__main__":
    B = 2            # batch
    OUTPUT_SIZE = 8  # MyModel(output_size=8, drop_out=0.1)
    DROP_OUT = 0.1

    key = jax.random.PRNGKey(0)
    k1, k2, k3, k4, k5, k6 = jax.random.split(key, 6)

    # [CLS] hidden state standing in for the BERT encoder output.
    h_cls = jax.random.normal(k1, (B, HIDDEN), dtype=jnp.float32)

    # Deterministic parameter init (pooler + classifier head).
    w_pool = jax.random.normal(k2, (HIDDEN, HIDDEN), dtype=jnp.float32) * 0.02
    b_pool = jax.random.normal(k3, (HIDDEN,), dtype=jnp.float32) * 0.02
    w_cls = jax.random.normal(k4, (HIDDEN, OUTPUT_SIZE), dtype=jnp.float32) * 0.02
    b_cls = jax.random.normal(k5, (OUTPUT_SIZE,), dtype=jnp.float32) * 0.02

    probs = bert_head_forward(
        h_cls, w_pool, b_pool, w_cls, b_cls, drop_out=DROP_OUT, rng_key=k6
    )
    probs = jax.block_until_ready(probs)

    assert probs.shape == (B, OUTPUT_SIZE)
    # rows of an exact softmax must sum to ~1
    assert bool(jnp.all(jnp.abs(jnp.sum(probs, axis=1) - 1.0) < 1e-4))
    assert bool(jnp.all(probs >= 0.0))
    print("KERNEL_OK")
</pallas_src>

<mosaic_0001>
module attributes {stable_mosaic.version = 11 : i64} {
  func.func @_head_kernel(%arg0: memref<8x768xbf16, #tpu.memory_space<vmem>>, %arg1: memref<768x768xbf16, #tpu.memory_space<vmem>>, %arg2: memref<1x768xf32, #tpu.memory_space<vmem>>, %arg3: memref<8x768xf32, #tpu.memory_space<vmem>>, %arg4: memref<768x8xbf16, #tpu.memory_space<vmem>>, %arg5: memref<1x8xf32, #tpu.memory_space<vmem>>, %arg6: memref<8x8xf32, #tpu.memory_space<vmem>>) attributes {dimension_semantics = [], scalar_prefetch = 0 : i64, scratch_operands = 0 : i64, tpu.core_type = #tpu.core_type<tc>} {
    %c0 = arith.constant 0 : index
    %c0_0 = arith.constant 0 : index
    %0 = vector.load %arg0[%c0, %c0_0] : memref<8x768xbf16, #tpu.memory_space<vmem>>, vector<8x768xbf16>
    %c0_1 = arith.constant 0 : index
    %c0_2 = arith.constant 0 : index
    %1 = vector.load %arg1[%c0_1, %c0_2] : memref<768x768xbf16, #tpu.memory_space<vmem>>, vector<768x768xbf16>
    %cst = arith.constant dense<0.000000e+00> : vector<8x768xf32>
    %2 = tpu.matmul %0, %1, %cst {dimension_numbers = #tpu.dot_dimension_numbers<[1], [0], [0], [1], [0, 0, 1, 1], [], []>} : vector<8x768xbf16>, vector<768x768xbf16>, vector<8x768xf32> -> vector<8x768xf32>
    %c0_3 = arith.constant 0 : index
    %c0_4 = arith.constant 0 : index
    %3 = vector.load %arg2[%c0_3, %c0_4] : memref<1x768xf32, #tpu.memory_space<vmem>>, vector<1x768xf32>
    %4 = vector.broadcast %3 : vector<1x768xf32> to vector<8x768xf32>
    %5 = arith.addf %2, %4 : vector<8x768xf32>
    %6 = math.tanh %5 : vector<8x768xf32>
    %cst_5 = arith.constant 0.000000e+00 : f32
    %7 = vector.broadcast %cst_5 : f32 to vector<8x768xf32>
    %8 = arith.maximumf %6, %7 : vector<8x768xf32>
    %c0_6 = arith.constant 0 : index
    %c0_7 = arith.constant 0 : index
    %9 = vector.load %arg3[%c0_6, %c0_7] : memref<8x768xf32, #tpu.memory_space<vmem>>, vector<8x768xf32>
    %10 = arith.mulf %8, %9 : vector<8x768xf32>
    %11 = arith.truncf %10 : vector<8x768xf32> to vector<8x768xbf16>
    %c0_8 = arith.constant 0 : index
    %c0_9 = arith.constant 0 : index
    %12 = vector.load %arg4[%c0_8, %c0_9] : memref<768x8xbf16, #tpu.memory_space<vmem>>, vector<768x8xbf16>
    %cst_10 = arith.constant dense<0.000000e+00> : vector<8x8xf32>
    %13 = tpu.matmul %11, %12, %cst_10 {dimension_numbers = #tpu.dot_dimension_numbers<[1], [0], [0], [1], [0, 0, 1, 1], [], []>} : vector<8x768xbf16>, vector<768x8xbf16>, vector<8x8xf32> -> vector<8x8xf32>
    %c0_11 = arith.constant 0 : index
    %c0_12 = arith.constant 0 : index
    %14 = vector.load %arg5[%c0_11, %c0_12] : memref<1x8xf32, #tpu.memory_space<vmem>>, vector<1x8xf32>
    %15 = vector.broadcast %14 : vector<1x8xf32> to vector<8x8xf32>
    %16 = arith.addf %13, %15 : vector<8x8xf32>
    %cst_13 = arith.constant dense<0xFF800000> : vector<8xf32>
    %17 = vector.multi_reduction <maximumf>, %16, %cst_13 [1] : vector<8x8xf32> to vector<8xf32>
    %18 = vector.shape_cast %17 : vector<8xf32> to vector<8x1xf32>
    %19 = vector.broadcast %18 : vector<8x1xf32> to vector<8x8xf32>
    %20 = arith.subf %16, %19 : vector<8x8xf32>
    %21 = math.exp %20 : vector<8x8xf32>
    %cst_14 = arith.constant dense<0.000000e+00> : vector<8xf32>
    %22 = vector.multi_reduction <add>, %21, %cst_14 [1] : vector<8x8xf32> to vector<8xf32>
    %23 = vector.shape_cast %22 : vector<8xf32> to vector<8x1xf32>
    %24 = vector.broadcast %23 : vector<8x1xf32> to vector<8x8xf32>
    %25 = arith.divf %21, %24 : vector<8x8xf32>
    %c0_15 = arith.constant 0 : index
    %c0_16 = arith.constant 0 : index
    %26 = vector.load %arg6[%c0_15, %c0_16] : memref<8x8xf32, #tpu.memory_space<vmem>>, vector<8x8xf32>
    tpu.vector_store %arg6[%c0_15, %c0_16], %25 {strides = array<i32>} : memref<8x8xf32, #tpu.memory_space<vmem>>, vector<8x8xf32>,
    return
  }
}

</mosaic_0001>

<llo_original>
// kernel: tpu_custom_call.1
$region0: #{tpu_custom_call.1}
  #allocation0 [shape = 'u32[]', space=smem, size = 0x4, offset = 0x4, fixed_abs, tag = 'smem constant byte address 0x4 - core index']
  #allocation1 [shape = 'u32[144,128]{1,0:T(1,128)}', space=vmem, size = 0x12000, scoped, tag = 'internal scratch']
  %s0 = inlined_call_operand.hbm [shape: bf16[8,768], index: 0, kind: input, shape index: {}]
  %s1 = inlined_call_operand.hbm [shape: bf16[768,768], index: 1, kind: input, shape index: {}]
  %s2 = inlined_call_operand.hbm [shape: f32[1,768], index: 2, kind: input, shape index: {}]
  %s3 = inlined_call_operand.hbm [shape: f32[8,768], index: 3, kind: input, shape index: {}]
  %s4 = inlined_call_operand.vmem [shape: bf16[768,8], index: 4, kind: input, shape index: {}]
  %s5 = inlined_call_operand.hbm [shape: f32[1,8], index: 5, kind: input, shape index: {}]
  %s6 = inlined_call_operand.hbm [shape: f32[8,8], index: 6, kind: output, shape index: {}]
  %s7 = sld [smem:[#allocation0]]
  $region54: #{tpu_custom_call.1} parent=0
    _
  %s9 = ssub.s32 1, %s7
  %s10 = scalar_select 0, %s9, %s7
  $region1: #{tpu_custom_call.1} parent=0
    #allocation2 [shape = 'u8[12288]{0}', space=vmem, size = 0x3000, scoped, tag = 'input window, operand 0, single buffered']
    #allocation3 [shape = 's32[1]{0}', space=sflag, size = 0x4, scoped, tag = 'scoped memory for tpu_custom_call.1']
    #allocation4 [shape = 's32[1]{0}', space=sflag, size = 0x4, scoped, tag = 'scoped memory for tpu_custom_call.1']
    #allocation5 [shape = 'u8[1179648]{0}', space=vmem, size = 0x120000, scoped, tag = 'input window, operand 1, single buffered']
    #allocation6 [shape = 's32[1]{0}', space=sflag, size = 0x4, scoped, tag = 'scoped memory for tpu_custom_call.1']
    #allocation7 [shape = 'u8[3072]{0}', space=vmem, size = 0xc00, scoped, tag = 'input window, operand 2, single buffered']
    #allocation8 [shape = 'u8[24576]{0}', space=vmem, size = 0x6000, scoped, tag = 'input window, operand 3, single buffered']
    #allocation9 [shape = 's32[1]{0}', space=sflag, size = 0x4, scoped, tag = 'scoped memory for tpu_custom_call.1']
    #allocation10 [shape = 'u8[512]{0}', space=vmem, size = 0x400, scoped, tag = 'input window, operand 5, single buffered']
    #allocation11 [shape = 'u8[4096]{0}', space=vmem, size = 0x1000, scoped, tag = 'output window, operand 0, single buffered']
    %11 = vsyncpa [#allocation3], 0
    %12 = vsyncpa [#allocation6], 0
    %13 = vsyncpa [#allocation9], 0
    %14 = vsyncpa [#allocation4], 0
    // Predicated region
    $region2: #{tpu_custom_call.1} parent=1 // pred_check
      _
    $region3: #{tpu_custom_call.1} parent=1 // pred_check_branch
      %16 = sbr.rel (0) target = $region5
    $region4: #{tpu_custom_call.1} parent=1 // pred_region
      %s18 = ssub.s32 384, 384
      %19 = vsyncadd [#allocation3], %s18
      %s21 = sshll.u32 [#allocation2], 4
      %s22 = int_to_ptr.vmem [resolvable:$true] %s21
      %24 = dma.hbm_to_vmem [thread:$0]  %s0, 384, %s22, [#allocation3]
    $region5: #{tpu_custom_call.1} parent=1 // pred_fallthru
      _
    // Predicated region
    $region6: #{tpu_custom_call.1} parent=1 // pred_check
      _
    $region7: #{tpu_custom_call.1} parent=1 // pred_check_branch
      %26 = sbr.rel (0) target = $region9
    $region8: #{tpu_custom_call.1} parent=1 // pred_region
      %s28 = ssub.s32 36864, 36864
      %29 = vsyncadd [#allocation6], %s28
      %s30 = sshll.u32 [#allocation5], 4
      %s31 = int_to_ptr.vmem [resolvable:$true] %s30
      %36 = dma.hbm_to_vmem [thread:$0]  %s1, 36864, %s31, [#allocation6], 384, 384, 24
    $region9: #{tpu_custom_call.1} parent=1 // pred_fallthru
      _
    // Predicated region
    $region10: #{tpu_custom_call.1} parent=1 // pred_check
      _
    $region11: #{tpu_custom_call.1} parent=1 // pred_check_branch
      %38 = sbr.rel (0) target = $region13
    $region12: #{tpu_custom_call.1} parent=1 // pred_region
      %s40 = ssub.s32 96, 96
      %41 = vsyncadd [#allocation6], %s40
      %s43 = sshll.u32 [#allocation7], 4
      %s44 = int_to_ptr.vmem [resolvable:$true] %s43
      %46 = dma.hbm_to_vmem [thread:$0]  %s2, 96, %s44, [#allocation6]
    $region13: #{tpu_custom_call.1} parent=1 // pred_fallthru
      _
    // Predicated region
    $region14: #{tpu_custom_call.1} parent=1 // pred_check
      _
    $region15: #{tpu_custom_call.1} parent=1 // pred_check_branch
      %48 = sbr.rel (0) target = $region17
    $region16: #{tpu_custom_call.1} parent=1 // pred_region
      %s50 = ssub.s32 768, 768
      %51 = vsyncadd [#allocation9], %s50
      %s53 = sshll.u32 [#allocation8], 4
      %s54 = int_to_ptr.vmem [resolvable:$true] %s53
      %56 = dma.hbm_to_vmem [thread:$0]  %s3, 768, %s54, [#allocation9]
    $region17: #{tpu_custom_call.1} parent=1 // pred_fallthru
      _
    // Predicated region
    $region18: #{tpu_custom_call.1} parent=1 // pred_check
      _
    $region19: #{tpu_custom_call.1} parent=1 // pred_check_branch
      %58 = sbr.rel (0) target = $region21
    $region20: #{tpu_custom_call.1} parent=1 // pred_region
      _
    $region21: #{tpu_custom_call.1} parent=1 // pred_fallthru
      _
    // Predicated region
    $region22: #{tpu_custom_call.1} parent=1 // pred_check
      _
    $region23: #{tpu_custom_call.1} parent=1 // pred_check_branch
      %60 = sbr.rel (0) target = $region25
    $region24: #{tpu_custom_call.1} parent=1 // pred_region
      %s62 = ssub.s32 16, 16
      %63 = vsyncadd [#allocation9], %s62
      %s65 = sshll.u32 [#allocation10], 4
      %s66 = int_to_ptr.vmem [resolvable:$true] %s65
      %68 = dma.hbm_to_vmem [thread:$0]  %s5, 16, %s66, [#allocation9]
    $region25: #{tpu_custom_call.1} parent=1 // pred_fallthru
      _
    // Predicated region
    $region26: #{tpu_custom_call.1} parent=1 // pred_check
      _
    $region27: #{tpu_custom_call.1} parent=1 // pred_check_branch
      %70 = sbr.rel (0) target = $region29
    $region28: #{tpu_custom_call.1} parent=1 // pred_region
      %71 = dma.done [#allocation3], 384
    $region29: #{tpu_custom_call.1} parent=1 // pred_fallthru
      _
    // Predicated region
    $region30: #{tpu_custom_call.1} parent=1 // pred_check
      _
    $region31: #{tpu_custom_call.1} parent=1 // pred_check_branch
      %73 = sbr.rel (0) target = $region33
    $region32: #{tpu_custom_call.1} parent=1 // pred_region
      %74 = dma.done [#allocation6], 36864
    $region33: #{tpu_custom_call.1} parent=1 // pred_fallthru
      _
    // Predicated region
    $region34: #{tpu_custom_call.1} parent=1 // pred_check
      _
    $region35: #{tpu_custom_call.1} parent=1 // pred_check_branch
      %76 = sbr.rel (0) target = $region37
    $region36: #{tpu_custom_call.1} parent=1 // pred_region
      %77 = dma.done [#allocation6], 96
    $region37: #{tpu_custom_call.1} parent=1 // pred_fallthru
      _
    // Predicated region
    $region38: #{tpu_custom_call.1} parent=1 // pred_check
      _
    $region39: #{tpu_custom_call.1} parent=1 // pred_check_branch
      %79 = sbr.rel (0) target = $region41
    $region40: #{tpu_custom_call.1} parent=1 // pred_region
      %80 = dma.done [#allocation9], 768
    $region41: #{tpu_custom_call.1} parent=1 // pred_fallthru
      _
    // Predicated region
    $region42: #{tpu_custom_call.1} parent=1 // pred_check
      _
    $region43: #{tpu_custom_call.1} parent=1 // pred_check_branch
      %82 = sbr.rel (0) target = $region45
    $region44: #{tpu_custom_call.1} parent=1 // pred_region
      %83 = dma.done [#allocation9], 16
    $region45: #{tpu_custom_call.1} parent=1 // pred_fallthru
      _
    %v85 = vld [vmem:[#allocation2] sm:$0xff]
    %v86 = vld [vmem:[#allocation2 + $0x8] sm:$0xff]
    %v87 = vld [vmem:[#allocation2 + $0x10] sm:$0xff]
    %v88 = vld [vmem:[#allocation5] sm:$0xff]
    %v89 = vld [vmem:[#allocation5 + $0x8] sm:$0xff]
    %v90 = vld [vmem:[#allocation5 + $0x10] sm:$0xff]
    %v91 = vld [vmem:[#allocation5 + $0x18] sm:$0xff]
    %v92 = vld [vmem:[#allocation5 + $0x20] sm:$0xff]
    %v93 = vld [vmem:[#allocation5 + $0x28] sm:$0xff]
    %v94 = vld [vmem:[#allocation5 + $0x30] sm:$0xff]
    %v95 = vld [vmem:[#allocation5 + $0x38] sm:$0xff]
    %v96 = vld [vmem:[#allocation5 + $0x40] sm:$0xff]
    %v97 = vld [vmem:[#allocation5 + $0x48] sm:$0xff]
    %v98 = vld [vmem:[#allocation5 + $0x50] sm:$0xff]
    %v99 = vld [vmem:[#allocation5 + $0x58] sm:$0xff]
    %v100 = vld [vmem:[#allocation5 + $0x60] sm:$0xff]
    %v101 = vld [vmem:[#allocation5 + $0x68] sm:$0xff]
    %v102 = vld [vmem:[#allocation5 + $0x70] sm:$0xff]
    %v103 = vld [vmem:[#allocation5 + $0x78] sm:$0xff]
    %v104 = vld [vmem:[#allocation5 + $0x80] sm:$0xff]
    %v105 = vld [vmem:[#allocation5 + $0x88] sm:$0xff]
    %v106 = vld [vmem:[#allocation5 + $0x90] sm:$0xff]
    %v107 = vld [vmem:[#allocation5 + $0x98] sm:$0xff]
    %v108 = vld [vmem:[#allocation5 + $0xa0] sm:$0xff]
    %v109 = vld [vmem:[#allocation5 + $0xa8] sm:$0xff]
    %v110 = vld [vmem:[#allocation5 + $0xb0] sm:$0xff]
    %v111 = vld [vmem:[#allocation5 + $0xb8] sm:$0xff]
    %v112 = vld [vmem:[#allocation5 + $0xc0] sm:$0xff]
    %v113 = vld [vmem:[#allocation5 + $0xc8] sm:$0xff]
    %v114 = vld [vmem:[#allocation5 + $0xd0] sm:$0xff]
    %v115 = vld [vmem:[#allocation5 + $0xd8] sm:$0xff]
    %v116 = vld [vmem:[#allocation5 + $0xe0] sm:$0xff]
    %v117 = vld [vmem:[#allocation5 + $0xe8] sm:$0xff]
    %v118 = vld [vmem:[#allocation5 + $0xf0] sm:$0xff]
    %v119 = vld [vmem:[#allocation5 + $0xf8] sm:$0xff]
    %v120 = vld [vmem:[#allocation5 + $0x100] sm:$0xff]
    %v121 = vld [vmem:[#allocation5 + $0x108] sm:$0xff]
    %v122 = vld [vmem:[#allocation5 + $0x110] sm:$0xff]
    %v123 = vld [vmem:[#allocation5 + $0x118] sm:$0xff]
    %v124 = vld [vmem:[#allocation5 + $0x120] sm:$0xff]
    %v125 = vld [vmem:[#allocation5 + $0x128] sm:$0xff]
    %v126 = vld [vmem:[#allocation5 + $0x130] sm:$0xff]
    %v127 = vld [vmem:[#allocation5 + $0x138] sm:$0xff]
    %v128 = vld [vmem:[#allocation5 + $0x140] sm:$0xff]
    %v129 = vld [vmem:[#allocation5 + $0x148] sm:$0xff]
    %v130 = vld [vmem:[#allocation5 + $0x150] sm:$0xff]
    %v131 = vld [vmem:[#allocation5 + $0x158] sm:$0xff]
    %v132 = vld [vmem:[#allocation5 + $0x160] sm:$0xff]
    %v133 = vld [vmem:[#allocation5 + $0x168] sm:$0xff]
    %v134 = vld [vmem:[#allocation5 + $0x170] sm:$0xff]
    %v135 = vld [vmem:[#allocation5 + $0x178] sm:$0xff]
    %v136 = vld [vmem:[#allocation5 + $0x180] sm:$0xff]
    %v137 = vld [vmem:[#allocation5 + $0x188] sm:$0xff]
    %v138 = vld [vmem:[#allocation5 + $0x190] sm:$0xff]
    %v139 = vld [vmem:[#allocation5 + $0x198] sm:$0xff]
    %v140 = vld [vmem:[#allocation5 + $0x1a0] sm:$0xff]
    %v141 = vld [vmem:[#allocation5 + $0x1a8] sm:$0xff]
    %v142 = vld [vmem:[#allocation5 + $0x1b0] sm:$0xff]
    %v143 = vld [vmem:[#allocation5 + $0x1b8] sm:$0xff]
    %v144 = vld [vmem:[#allocation5 + $0x1c0] sm:$0xff]
    %v145 = vld [vmem:[#allocation5 + $0x1c8] sm:$0xff]
    %v146 = vld [vmem:[#allocation5 + $0x1d0] sm:$0xff]
    %v147 = vld [vmem:[#allocation5 + $0x1d8] sm:$0xff]
    %v148 = vld [vmem:[#allocation5 + $0x1e0] sm:$0xff]
    %v149 = vld [vmem:[#allocation5 + $0x1e8] sm:$0xff]
    %v150 = vld [vmem:[#allocation5 + $0x1f0] sm:$0xff]
    %v151 = vld [vmem:[#allocation5 + $0x1f8] sm:$0xff]
    %v152 = vld [vmem:[#allocation5 + $0x200] sm:$0xff]
    %v153 = vld [vmem:[#allocation5 + $0x208] sm:$0xff]
    %v154 = vld [vmem:[#allocation5 + $0x210] sm:$0xff]
    %v155 = vld [vmem:[#allocation5 + $0x218] sm:$0xff]
    %v156 = vld [vmem:[#allocation5 + $0x220] sm:$0xff]
    %v157 = vld [vmem:[#allocation5 + $0x228] sm:$0xff]
    %v158 = vld [vmem:[#allocation5 + $0x230] sm:$0xff]
    %v159 = vld [vmem:[#allocation5 + $0x238] sm:$0xff]
    %v160 = vld [vmem:[#allocation5 + $0x240] sm:$0xff]
    %v161 = vld [vmem:[#allocation5 + $0x248] sm:$0xff]
    %v162 = vld [vmem:[#allocation5 + $0x250] sm:$0xff]
    %v163 = vld [vmem:[#allocation5 + $0x258] sm:$0xff]
    %v164 = vld [vmem:[#allocation5 + $0x260] sm:$0xff]
    %v165 = vld [vmem:[#allocation5 + $0x268] sm:$0xff]
    %v166 = vld [vmem:[#allocation5 + $0x270] sm:$0xff]
    %v167 = vld [vmem:[#allocation5 + $0x278] sm:$0xff]
    %v168 = vld [vmem:[#allocation5 + $0x280] sm:$0xff]
    %v169 = vld [vmem:[#allocation5 + $0x288] sm:$0xff]
    %v170 = vld [vmem:[#allocation5 + $0x290] sm:$0xff]
    %v171 = vld [vmem:[#allocation5 + $0x298] sm:$0xff]
    %v172 = vld [vmem:[#allocation5 + $0x2a0] sm:$0xff]
    %v173 = vld [vmem:[#allocation5 + $0x2a8] sm:$0xff]
    %v174 = vld [vmem:[#allocation5 + $0x2b0] sm:$0xff]
    %v175 = vld [vmem:[#allocation5 + $0x2b8] sm:$0xff]
    %v176 = vld [vmem:[#allocation5 + $0x2c0] sm:$0xff]
    %v177 = vld [vmem:[#allocation5 + $0x2c8] sm:$0xff]
    %v178 = vld [vmem:[#allocation5 + $0x2d0] sm:$0xff]
    %v179 = vld [vmem:[#allocation5 + $0x2d8] sm:$0xff]
    %v180 = vld [vmem:[#allocation5 + $0x2e0] sm:$0xff]
    %v181 = vld [vmem:[#allocation5 + $0x2e8] sm:$0xff]
    %v182 = vld [vmem:[#allocation5 + $0x2f0] sm:$0xff]
    %v183 = vld [vmem:[#allocation5 + $0x2f8] sm:$0xff]
    %v184 = vld [vmem:[#allocation5 + $0x300] sm:$0xff]
    %v185 = vld [vmem:[#allocation5 + $0x308] sm:$0xff]
    %v186 = vld [vmem:[#allocation5 + $0x310] sm:$0xff]
    %v187 = vld [vmem:[#allocation5 + $0x318] sm:$0xff]
    %v188 = vld [vmem:[#allocation5 + $0x320] sm:$0xff]
    %v189 = vld [vmem:[#allocation5 + $0x328] sm:$0xff]
    %v190 = vld [vmem:[#allocation5 + $0x330] sm:$0xff]
    %v191 = vld [vmem:[#allocation5 + $0x338] sm:$0xff]
    %v192 = vld [vmem:[#allocation5 + $0x340] sm:$0xff]
    %v193 = vld [vmem:[#allocation5 + $0x348] sm:$0xff]
    %v194 = vld [vmem:[#allocation5 + $0x350] sm:$0xff]
    %v195 = vld [vmem:[#allocation5 + $0x358] sm:$0xff]
    %v196 = vld [vmem:[#allocation5 + $0x360] sm:$0xff]
    %v197 = vld [vmem:[#allocation5 + $0x368] sm:$0xff]
    %v198 = vld [vmem:[#allocation5 + $0x370] sm:$0xff]
    %v199 = vld [vmem:[#allocation5 + $0x378] sm:$0xff]
    %v200 = vld [vmem:[#allocation5 + $0x380] sm:$0xff]
    %v201 = vld [vmem:[#allocation5 + $0x388] sm:$0xff]
    %v202 = vld [vmem:[#allocation5 + $0x390] sm:$0xff]
    %v203 = vld [vmem:[#allocation5 + $0x398] sm:$0xff]
    %v204 = vld [vmem:[#allocation5 + $0x3a0] sm:$0xff]
    %v205 = vld [vmem:[#allocation5 + $0x3a8] sm:$0xff]
    %v206 = vld [vmem:[#allocation5 + $0x3b0] sm:$0xff]
    %v207 = vld [vmem:[#allocation5 + $0x3b8] sm:$0xff]
    %v208 = vld [vmem:[#allocation5 + $0x3c0] sm:$0xff]
    %v209 = vld [vmem:[#allocation5 + $0x3c8] sm:$0xff]
    %v210 = vld [vmem:[#allocation5 + $0x3d0] sm:$0xff]
    %v211 = vld [vmem:[#allocation5 + $0x3d8] sm:$0xff]
    %v212 = vld [vmem:[#allocation5 + $0x3e0] sm:$0xff]
    %v213 = vld [vmem:[#allocation5 + $0x3e8] sm:$0xff]
    %v214 = vld [vmem:[#allocation5 + $0x3f0] sm:$0xff]
    %v215 = vld [vmem:[#allocation5 + $0x3f8] sm:$0xff]
    %v216 = vld [vmem:[#allocation5 + $0x400] sm:$0xff]
    %v217 = vld [vmem:[#allocation5 + $0x408] sm:$0xff]
    %v218 = vld [vmem:[#allocation5 + $0x410] sm:$0xff]
    %v219 = vld [vmem:[#allocation5 + $0x418] sm:$0xff]
    %v220 = vld [vmem:[#allocation5 + $0x420] sm:$0xff]
    %v221 = vld [vmem:[#allocation5 + $0x428] sm:$0xff]
    %v222 = vld [vmem:[#allocation5 + $0x430] sm:$0xff]
    %v223 = vld [vmem:[#allocation5 + $0x438] sm:$0xff]
    %v224 = vld [vmem:[#allocation5 + $0x440] sm:$0xff]
    %v225 = vld [vmem:[#allocation5 + $0x448] sm:$0xff]
    %v226 = vld [vmem:[#allocation5 + $0x450] sm:$0xff]
    %v227 = vld [vmem:[#allocation5 + $0x458] sm:$0xff]
    %v228 = vld [vmem:[#allocation5 + $0x460] sm:$0xff]
    %v229 = vld [vmem:[#allocation5 + $0x468] sm:$0xff]
    %v230 = vld [vmem:[#allocation5 + $0x470] sm:$0xff]
    %v231 = vld [vmem:[#allocation5 + $0x478] sm:$0xff]
    %v232 = vld [vmem:[#allocation5 + $0x480] sm:$0xff]
    %v233 = vld [vmem:[#allocation5 + $0x488] sm:$0xff]
    %v234 = vld [vmem:[#allocation5 + $0x490] sm:$0xff]
    %v235 = vld [vmem:[#allocation5 + $0x498] sm:$0xff]
    %v236 = vld [vmem:[#allocation5 + $0x4a0] sm:$0xff]
    %v237 = vld [vmem:[#allocation5 + $0x4a8] sm:$0xff]
    %v238 = vld [vmem:[#allocation5 + $0x4b0] sm:$0xff]
    %v239 = vld [vmem:[#allocation5 + $0x4b8] sm:$0xff]
    %v240 = vld [vmem:[#allocation5 + $0x4c0] sm:$0xff]
    %v241 = vld [vmem:[#allocation5 + $0x4c8] sm:$0xff]
    %v242 = vld [vmem:[#allocation5 + $0x4d0] sm:$0xff]
    %v243 = vld [vmem:[#allocation5 + $0x4d8] sm:$0xff]
    %v244 = vld [vmem:[#allocation5 + $0x4e0] sm:$0xff]
    %v245 = vld [vmem:[#allocation5 + $0x4e8] sm:$0xff]
    %v246 = vld [vmem:[#allocation5 + $0x4f0] sm:$0xff]
    %v247 = vld [vmem:[#allocation5 + $0x4f8] sm:$0xff]
    %v248 = vld [vmem:[#allocation5 + $0x500] sm:$0xff]
    %v249 = vld [vmem:[#allocation5 + $0x508] sm:$0xff]
    %v250 = vld [vmem:[#allocation5 + $0x510] sm:$0xff]
    %v251 = vld [vmem:[#allocation5 + $0x518] sm:$0xff]
    %v252 = vld [vmem:[#allocation5 + $0x520] sm:$0xff]
    %v253 = vld [vmem:[#allocation5 + $0x528] sm:$0xff]
    %v254 = vld [vmem:[#allocation5 + $0x530] sm:$0xff]
    %v255 = vld [vmem:[#allocation5 + $0x538] sm:$0xff]
    %v256 = vld [vmem:[#allocation5 + $0x540] sm:$0xff]
    %v257 = vld [vmem:[#allocation5 + $0x548] sm:$0xff]
    %v258 = vld [vmem:[#allocation5 + $0x550] sm:$0xff]
    %v259 = vld [vmem:[#allocation5 + $0x558] sm:$0xff]
    %v260 = vld [vmem:[#allocation5 + $0x560] sm:$0xff]
    %v261 = vld [vmem:[#allocation5 + $0x568] sm:$0xff]
    %v262 = vld [vmem:[#allocation5 + $0x570] sm:$0xff]
    %v263 = vld [vmem:[#allocation5 + $0x578] sm:$0xff]
    %v264 = vld [vmem:[#allocation5 + $0x580] sm:$0xff]
    %v265 = vld [vmem:[#allocation5 + $0x588] sm:$0xff]
    %v266 = vld [vmem:[#allocation5 + $0x590] sm:$0xff]
    %v267 = vld [vmem:[#allocation5 + $0x598] sm:$0xff]
    %v268 = vld [vmem:[#allocation5 + $0x5a0] sm:$0xff]
    %v269 = vld [vmem:[#allocation5 + $0x5a8] sm:$0xff]
    %v270 = vld [vmem:[#allocation5 + $0x5b0] sm:$0xff]
    %v271 = vld [vmem:[#allocation5 + $0x5b8] sm:$0xff]
    %v272 = vld [vmem:[#allocation5 + $0x5c0] sm:$0xff]
    %v273 = vld [vmem:[#allocation5 + $0x5c8] sm:$0xff]
    %v274 = vld [vmem:[#allocation5 + $0x5d0] sm:$0xff]
    %v275 = vld [vmem:[#allocation5 + $0x5d8] sm:$0xff]
    %v276 = vld [vmem:[#allocation5 + $0x5e0] sm:$0xff]
    %v277 = vld [vmem:[#allocation5 + $0x5e8] sm:$0xff]
    %v278 = vld [vmem:[#allocation5 + $0x5f0] sm:$0xff]
    %v279 = vld [vmem:[#allocation5 + $0x5f8] sm:$0xff]
    %v280 = vld [vmem:[#allocation5 + $0x600] sm:$0xff]
    %v281 = vld [vmem:[#allocation5 + $0x608] sm:$0xff]
    %v282 = vld [vmem:[#allocation5 + $0x610] sm:$0xff]
    %v283 = vld [vmem:[#allocation5 + $0x618] sm:$0xff]
    %v284 = vld [vmem:[#allocation5 + $0x620] sm:$0xff]
    %v285 = vld [vmem:[#allocation5 + $0x628] sm:$0xff]
    %v286 = vld [vmem:[#allocation5 + $0x630] sm:$0xff]
    %v287 = vld [vmem:[#allocation5 + $0x638] sm:$0xff]
    %v288 = vld [vmem:[#allocation5 + $0x640] sm:$0xff]
    %v289 = vld [vmem:[#allocation5 + $0x648] sm:$0xff]
    %v290 = vld [vmem:[#allocation5 + $0x650] sm:$0xff]
    %v291 = vld [vmem:[#allocation5 + $0x658] sm:$0xff]
    %v292 = vld [vmem:[#allocation5 + $0x660] sm:$0xff]
    %v293 = vld [vmem:[#allocation5 + $0x668] sm:$0xff]
    %v294 = vld [vmem:[#allocation5 + $0x670] sm:$0xff]
    %v295 = vld [vmem:[#allocation5 + $0x678] sm:$0xff]
    %v296 = vld [vmem:[#allocation5 + $0x680] sm:$0xff]
    %v297 = vld [vmem:[#allocation5 + $0x688] sm:$0xff]
    %v298 = vld [vmem:[#allocation5 + $0x690] sm:$0xff]
    %v299 = vld [vmem:[#allocation5 + $0x698] sm:$0xff]
    %v300 = vld [vmem:[#allocation5 + $0x6a0] sm:$0xff]
    %v301 = vld [vmem:[#allocation5 + $0x6a8] sm:$0xff]
    %v302 = vld [vmem:[#allocation5 + $0x6b0] sm:$0xff]
    %v303 = vld [vmem:[#allocation5 + $0x6b8] sm:$0xff]
    %v304 = vld [vmem:[#allocation5 + $0x6c0] sm:$0xff]
    %v305 = vld [vmem:[#allocation5 + $0x6c8] sm:$0xff]
    %v306 = vld [vmem:[#allocation5 + $0x6d0] sm:$0xff]
    %v307 = vld [vmem:[#allocation5 + $0x6d8] sm:$0xff]
    %v308 = vld [vmem:[#allocation5 + $0x6e0] sm:$0xff]
    %v309 = vld [vmem:[#allocation5 + $0x6e8] sm:$0xff]
    %v310 = vld [vmem:[#allocation5 + $0x6f0] sm:$0xff]
    %v311 = vld [vmem:[#allocation5 + $0x6f8] sm:$0xff]
    %v312 = vld [vmem:[#allocation5 + $0x700] sm:$0xff]
    %v313 = vld [vmem:[#allocation5 + $0x708] sm:$0xff]
    %v314 = vld [vmem:[#allocation5 + $0x710] sm:$0xff]
    %v315 = vld [vmem:[#allocation5 + $0x718] sm:$0xff]
    %v316 = vld [vmem:[#allocation5 + $0x720] sm:$0xff]
    %v317 = vld [vmem:[#allocation5 + $0x728] sm:$0xff]
    %v318 = vld [vmem:[#allocation5 + $0x730] sm:$0xff]
    %v319 = vld [vmem:[#allocation5 + $0x738] sm:$0xff]
    %v320 = vld [vmem:[#allocation5 + $0x740] sm:$0xff]
    %v321 = vld [vmem:[#allocation5 + $0x748] sm:$0xff]
    %v322 = vld [vmem:[#allocation5 + $0x750] sm:$0xff]
    %v323 = vld [vmem:[#allocation5 + $0x758] sm:$0xff]
    %v324 = vld [vmem:[#allocation5 + $0x760] sm:$0xff]
    %v325 = vld [vmem:[#allocation5 + $0x768] sm:$0xff]
    %v326 = vld [vmem:[#allocation5 + $0x770] sm:$0xff]
    %v327 = vld [vmem:[#allocation5 + $0x778] sm:$0xff]
    %v328 = vld [vmem:[#allocation5 + $0x780] sm:$0xff]
    %v329 = vld [vmem:[#allocation5 + $0x788] sm:$0xff]
    %v330 = vld [vmem:[#allocation5 + $0x790] sm:$0xff]
    %v331 = vld [vmem:[#allocation5 + $0x798] sm:$0xff]
    %v332 = vld [vmem:[#allocation5 + $0x7a0] sm:$0xff]
    %v333 = vld [vmem:[#allocation5 + $0x7a8] sm:$0xff]
    %v334 = vld [vmem:[#allocation5 + $0x7b0] sm:$0xff]
    %v335 = vld [vmem:[#allocation5 + $0x7b8] sm:$0xff]
    %v336 = vld [vmem:[#allocation5 + $0x7c0] sm:$0xff]
    %v337 = vld [vmem:[#allocation5 + $0x7c8] sm:$0xff]
    %v338 = vld [vmem:[#allocation5 + $0x7d0] sm:$0xff]
    %v339 = vld [vmem:[#allocation5 + $0x7d8] sm:$0xff]
    %v340 = vld [vmem:[#allocation5 + $0x7e0] sm:$0xff]
    %v341 = vld [vmem:[#allocation5 + $0x7e8] sm:$0xff]
    %v342 = vld [vmem:[#allocation5 + $0x7f0] sm:$0xff]
    %v343 = vld [vmem:[#allocation5 + $0x7f8] sm:$0xff]
    %v344 = vld [vmem:[#allocation5 + $0x800] sm:$0xff]
    %v345 = vld [vmem:[#allocation5 + $0x808] sm:$0xff]
    %v346 = vld [vmem:[#allocation5 + $0x810] sm:$0xff]
    %v347 = vld [vmem:[#allocation5 + $0x818] sm:$0xff]
    %v348 = vld [vmem:[#allocation5 + $0x820] sm:$0xff]
    %v349 = vld [vmem:[#allocation5 + $0x828] sm:$0xff]
    %v350 = vld [vmem:[#allocation5 + $0x830] sm:$0xff]
    %v351 = vld [vmem:[#allocation5 + $0x838] sm:$0xff]
    %v352 = vld [vmem:[#allocation5 + $0x840] sm:$0xff]
    %v353 = vld [vmem:[#allocation5 + $0x848] sm:$0xff]
    %v354 = vld [vmem:[#allocation5 + $0x850] sm:$0xff]
    %v355 = vld [vmem:[#allocation5 + $0x858] sm:$0xff]
    %v356 = vld [vmem:[#allocation5 + $0x860] sm:$0xff]
    %v357 = vld [vmem:[#allocation5 + $0x868] sm:$0xff]
    %v358 = vld [vmem:[#allocation5 + $0x870] sm:$0xff]
    %v359 = vld [vmem:[#allocation5 + $0x878] sm:$0xff]
    %v360 = vld [vmem:[#allocation5 + $0x880] sm:$0xff]
    %v361 = vld [vmem:[#allocation5 + $0x888] sm:$0xff]
    %v362 = vld [vmem:[#allocation5 + $0x890] sm:$0xff]
    %v363 = vld [vmem:[#allocation5 + $0x898] sm:$0xff]
    %v364 = vld [vmem:[#allocation5 + $0x8a0] sm:$0xff]
    %v365 = vld [vmem:[#allocation5 + $0x8a8] sm:$0xff]
    %v366 = vld [vmem:[#allocation5 + $0x8b0] sm:$0xff]
    %v367 = vld [vmem:[#allocation5 + $0x8b8] sm:$0xff]
    %v368 = vld [vmem:[#allocation5 + $0x8c0] sm:$0xff]
    %v369 = vld [vmem:[#allocation5 + $0x8c8] sm:$0xff]
    %v370 = vld [vmem:[#allocation5 + $0x8d0] sm:$0xff]
    %v371 = vld [vmem:[#allocation5 + $0x8d8] sm:$0xff]
    %v372 = vld [vmem:[#allocation5 + $0x8e0] sm:$0xff]
    %v373 = vld [vmem:[#allocation5 + $0x8e8] sm:$0xff]
    %v374 = vld [vmem:[#allocation5 + $0x8f0] sm:$0xff]
    %v375 = vld [vmem:[#allocation5 + $0x8f8] sm:$0xff]
    %v376 = vld [vmem:[#allocation7] sm:$0x3f]
    %v378 = vlaneseq
    %v379 = vshrl.u32 %v378, 7
    %v380 = vsub.s32 0, %v379
    %v381 = vrot.slane %v376, %v380
    %v382 = vlaneseq
    %v383 = vshrl.u32 %v382, 7
    %v384 = vsub.s32 1, %v383
    %v385 = vrot.slane %v376, %v384
    %v386 = vlaneseq
    %v387 = vshrl.u32 %v386, 7
    %v388 = vsub.s32 2, %v387
    %v389 = vrot.slane %v376, %v388
    %v390 = vlaneseq
    %v391 = vshrl.u32 %v390, 7
    %v392 = vsub.s32 3, %v391
    %v393 = vrot.slane %v376, %v392
    %v394 = vlaneseq
    %v395 = vshrl.u32 %v394, 7
    %v396 = vsub.s32 4, %v395
    %v397 = vrot.slane %v376, %v396
    %v398 = vlaneseq
    %v399 = vshrl.u32 %v398, 7
    %v400 = vsub.s32 5, %v399
    %v401 = vrot.slane %v376, %v400
    %v411 = vunpack.c.l.b16 %v85
    %v412 = vunpack.c.h.b16 %v85
    %v413 = vunpack.c.l.b16 %v86
    %v414 = vunpack.c.h.b16 %v86
    %v415 = vunpack.c.l.b16 %v87
    %v416 = vunpack.c.h.b16 %v87
    %v417 = vpack.c.b16 %v411, %v411
    %v418 = vpack.c.b16 %v412, %v412
    %v419 = vpack.c.b16 %v413, %v413
    %v420 = vpack.c.b16 %v414, %v414
    %v421 = vpack.c.b16 %v415, %v415
    %v422 = vpack.c.b16 %v416, %v416
    %v717 = vunpack.c.l.b16 %v88
    %v718 = vunpack.c.h.b16 %v88
    %v719 = vunpack.c.l.b16 %v89
    %v720 = vunpack.c.h.b16 %v89
    %v721 = vunpack.c.l.b16 %v90
    %v722 = vunpack.c.h.b16 %v90
    %v723 = vunpack.c.l.b16 %v91
    %v724 = vunpack.c.h.b16 %v91
    %v725 = vunpack.c.l.b16 %v92
    %v726 = vunpack.c.h.b16 %v92
    %v727 = vunpack.c.l.b16 %v93
    %v728 = vunpack.c.h.b16 %v93
    %v729 = vunpack.c.l.b16 %v94
    %v730 = vunpack.c.h.b16 %v94
    %v731 = vunpack.c.l.b16 %v95
    %v732 = vunpack.c.h.b16 %v95
    %v733 = vunpack.c.l.b16 %v96
    %v734 = vunpack.c.h.b16 %v96
    %v735 = vunpack.c.l.b16 %v97
    %v736 = vunpack.c.h.b16 %v97
    %v737 = vunpack.c.l.b16 %v98
    %v738 = vunpack.c.h.b16 %v98
    %v739 = vunpack.c.l.b16 %v99
    %v740 = vunpack.c.h.b16 %v99
    %v741 = vunpack.c.l.b16 %v100
    %v742 = vunpack.c.h.b16 %v100
    %v743 = vunpack.c.l.b16 %v101
    %v744 = vunpack.c.h.b16 %v101
    %v745 = vunpack.c.l.b16 %v102
    %v746 = vunpack.c.h.b16 %v102
    %v747 = vunpack.c.l.b16 %v103
    %v748 = vunpack.c.h.b16 %v103
    %v749 = vunpack.c.l.b16 %v104
    %v750 = vunpack.c.h.b16 %v104
    %v751 = vunpack.c.l.b16 %v105
    %v752 = vunpack.c.h.b16 %v105
    %v753 = vunpack.c.l.b16 %v106
    %v754 = vunpack.c.h.b16 %v106
    %v755 = vunpack.c.l.b16 %v107
    %v756 = vunpack.c.h.b16 %v107
    %v757 = vunpack.c.l.b16 %v108
    %v758 = vunpack.c.h.b16 %v108
    %v759 = vunpack.c.l.b16 %v109
    %v760 = vunpack.c.h.b16 %v109
    %v761 = vunpack.c.l.b16 %v110
    %v762 = vunpack.c.h.b16 %v110
    %v763 = vunpack.c.l.b16 %v111
    %v764 = vunpack.c.h.b16 %v111
    %v765 = vunpack.c.l.b16 %v112
    %v766 = vunpack.c.h.b16 %v112
    %v767 = vunpack.c.l.b16 %v113
    %v768 = vunpack.c.h.b16 %v113
    %v769 = vunpack.c.l.b16 %v114
    %v770 = vunpack.c.h.b16 %v114
    %v771 = vunpack.c.l.b16 %v115
    %v772 = vunpack.c.h.b16 %v115
    %v773 = vunpack.c.l.b16 %v116
    %v774 = vunpack.c.h.b16 %v116
    %v775 = vunpack.c.l.b16 %v117
    %v776 = vunpack.c.h.b16 %v117
    %v777 = vunpack.c.l.b16 %v118
    %v778 = vunpack.c.h.b16 %v118
    %v779 = vunpack.c.l.b16 %v119
    %v780 = vunpack.c.h.b16 %v119
    %v781 = vunpack.c.l.b16 %v120
    %v782 = vunpack.c.h.b16 %v120
    %v783 = vunpack.c.l.b16 %v121
    %v784 = vunpack.c.h.b16 %v121
    %v785 = vunpack.c.l.b16 %v122
    %v786 = vunpack.c.h.b16 %v122
    %v787 = vunpack.c.l.b16 %v123
    %v788 = vunpack.c.h.b16 %v123
    %v789 = vunpack.c.l.b16 %v124
    %v790 = vunpack.c.h.b16 %v124
    %v791 = vunpack.c.l.b16 %v125
    %v792 = vunpack.c.h.b16 %v125
    %v793 = vunpack.c.l.b16 %v126
    %v794 = vunpack.c.h.b16 %v126
    %v795 = vunpack.c.l.b16 %v127
    %v796 = vunpack.c.h.b16 %v127
    %v797 = vunpack.c.l.b16 %v128
    %v798 = vunpack.c.h.b16 %v128
    %v799 = vunpack.c.l.b16 %v129
    %v800 = vunpack.c.h.b16 %v129
    %v801 = vunpack.c.l.b16 %v130
    %v802 = vunpack.c.h.b16 %v130
    %v803 = vunpack.c.l.b16 %v131
    %v804 = vunpack.c.h.b16 %v131
    %v805 = vunpack.c.l.b16 %v132
    %v806 = vunpack.c.h.b16 %v132
    %v807 = vunpack.c.l.b16 %v133
    %v808 = vunpack.c.h.b16 %v133
    %v809 = vunpack.c.l.b16 %v134
    %v810 = vunpack.c.h.b16 %v134
    %v811 = vunpack.c.l.b16 %v135
    %v812 = vunpack.c.h.b16 %v135
    %v813 = vunpack.c.l.b16 %v136
    %v814 = vunpack.c.h.b16 %v136
    %v815 = vunpack.c.l.b16 %v137
    %v816 = vunpack.c.h.b16 %v137
    %v817 = vunpack.c.l.b16 %v138
    %v818 = vunpack.c.h.b16 %v138
    %v819 = vunpack.c.l.b16 %v139
    %v820 = vunpack.c.h.b16 %v139
    %v821 = vunpack.c.l.b16 %v140
    %v822 = vunpack.c.h.b16 %v140
    %v823 = vunpack.c.l.b16 %v141
    %v824 = vunpack.c.h.b16 %v141
    %v825 = vunpack.c.l.b16 %v142
    %v826 = vunpack.c.h.b16 %v142
    %v827 = vunpack.c.l.b16 %v143
    %v828 = vunpack.c.h.b16 %v143
    %v829 = vunpack.c.l.b16 %v144
    %v830 = vunpack.c.h.b16 %v144
    %v831 = vunpack.c.l.b16 %v145
    %v832 = vunpack.c.h.b16 %v145
    %v833 = vunpack.c.l.b16 %v146
    %v834 = vunpack.c.h.b16 %v146
    %v835 = vunpack.c.l.b16 %v147
    %v836 = vunpack.c.h.b16 %v147
    %v837 = vunpack.c.l.b16 %v148
    %v838 = vunpack.c.h.b16 %v148
    %v839 = vunpack.c.l.b16 %v149
    %v840 = vunpack.c.h.b16 %v149
    %v841 = vunpack.c.l.b16 %v150
    %v842 = vunpack.c.h.b16 %v150
    %v843 = vunpack.c.l.b16 %v151
    %v844 = vunpack.c.h.b16 %v151
    %v845 = vunpack.c.l.b16 %v152
    %v846 = vunpack.c.h.b16 %v152
    %v847 = vunpack.c.l.b16 %v153
    %v848 = vunpack.c.h.b16 %v153
    %v849 = vunpack.c.l.b16 %v154
    %v850 = vunpack.c.h.b16 %v154
    %v851 = vunpack.c.l.b16 %v155
    %v852 = vunpack.c.h.b16 %v155
    %v853 = vunpack.c.l.b16 %v156
    %v854 = vunpack.c.h.b16 %v156
    %v855 = vunpack.c.l.b16 %v157
    %v856 = vunpack.c.h.b16 %v157
    %v857 = vunpack.c.l.b16 %v158
    %v858 = vunpack.c.h.b16 %v158
    %v859 = vunpack.c.l.b16 %v159
    %v860 = vunpack.c.h.b16 %v159
    %v861 = vunpack.c.l.b16 %v160
    %v862 = vunpack.c.h.b16 %v160
    %v863 = vunpack.c.l.b16 %v161
    %v864 = vunpack.c.h.b16 %v161
    %v865 = vunpack.c.l.b16 %v162
    %v866 = vunpack.c.h.b16 %v162
    %v867 = vunpack.c.l.b16 %v163
    %v868 = vunpack.c.h.b16 %v163
    %v869 = vunpack.c.l.b16 %v164
    %v870 = vunpack.c.h.b16 %v164
    %v871 = vunpack.c.l.b16 %v165
    %v872 = vunpack.c.h.b16 %v165
    %v873 = vunpack.c.l.b16 %v166
    %v874 = vunpack.c.h.b16 %v166
    %v875 = vunpack.c.l.b16 %v167
    %v876 = vunpack.c.h.b16 %v167
    %v877 = vunpack.c.l.b16 %v168
    %v878 = vunpack.c.h.b16 %v168
    %v879 = vunpack.c.l.b16 %v169
    %v880 = vunpack.c.h.b16 %v169
    %v881 = vunpack.c.l.b16 %v170
    %v882 = vunpack.c.h.b16 %v170
    %v883 = vunpack.c.l.b16 %v171
    %v884 = vunpack.c.h.b16 %v171
    %v885 = vunpack.c.l.b16 %v172
    %v886 = vunpack.c.h.b16 %v172
    %v887 = vunpack.c.l.b16 %v173
    %v888 = vunpack.c.h.b16 %v173
    %v889 = vunpack.c.l.b16 %v174
    %v890 = vunpack.c.h.b16 %v174
    %v891 = vunpack.c.l.b16 %v175
    %v892 = vunpack.c.h.b16 %v175
    %v893 = vunpack.c.l.b16 %v176
    %v894 = vunpack.c.h.b16 %v176
    %v895 = vunpack.c.l.b16 %v177
    %v896 = vunpack.c.h.b16 %v177
    %v897 = vunpack.c.l.b16 %v178
    %v898 = vunpack.c.h.b16 %v178
    %v899 = vunpack.c.l.b16 %v179
    %v900 = vunpack.c.h.b16 %v179
    %v901 = vunpack.c.l.b16 %v180
    %v902 = vunpack.c.h.b16 %v180
    %v903 = vunpack.c.l.b16 %v181
    %v904 = vunpack.c.h.b16 %v181
    %v905 = vunpack.c.l.b16 %v182
    %v906 = vunpack.c.h.b16 %v182
    %v907 = vunpack.c.l.b16 %v183
    %v908 = vunpack.c.h.b16 %v183
    %v909 = vunpack.c.l.b16 %v184
    %v910 = vunpack.c.h.b16 %v184
    %v911 = vunpack.c.l.b16 %v185
    %v912 = vunpack.c.h.b16 %v185
    %v913 = vunpack.c.l.b16 %v186
    %v914 = vunpack.c.h.b16 %v186
    %v915 = vunpack.c.l.b16 %v187
    %v916 = vunpack.c.h.b16 %v187
    %v917 = vunpack.c.l.b16 %v188
    %v918 = vunpack.c.h.b16 %v188
    %v919 = vunpack.c.l.b16 %v189
    %v920 = vunpack.c.h.b16 %v189
    %v921 = vunpack.c.l.b16 %v190
    %v922 = vunpack.c.h.b16 %v190
    %v923 = vunpack.c.l.b16 %v191
    %v924 = vunpack.c.h.b16 %v191
    %v925 = vunpack.c.l.b16 %v192
    %v926 = vunpack.c.h.b16 %v192
    %v927 = vunpack.c.l.b16 %v193
    %v928 = vunpack.c.h.b16 %v193
    %v929 = vunpack.c.l.b16 %v194
    %v930 = vunpack.c.h.b16 %v194
    %v931 = vunpack.c.l.b16 %v195
    %v932 = vunpack.c.h.b16 %v195
    %v933 = vunpack.c.l.b16 %v196
    %v934 = vunpack.c.h.b16 %v196
    %v935 = vunpack.c.l.b16 %v197
    %v936 = vunpack.c.h.b16 %v197
    %v937 = vunpack.c.l.b16 %v198
    %v938 = vunpack.c.h.b16 %v198
    %v939 = vunpack.c.l.b16 %v199
    %v940 = vunpack.c.h.b16 %v199
    %v941 = vunpack.c.l.b16 %v200
    %v942 = vunpack.c.h.b16 %v200
    %v943 = vunpack.c.l.b16 %v201
    %v944 = vunpack.c.h.b16 %v201
    %v945 = vunpack.c.l.b16 %v202
    %v946 = vunpack.c.h.b16 %v202
    %v947 = vunpack.c.l.b16 %v203
    %v948 = vunpack.c.h.b16 %v203
    %v949 = vunpack.c.l.b16 %v204
    %v950 = vunpack.c.h.b16 %v204
    %v951 = vunpack.c.l.b16 %v205
    %v952 = vunpack.c.h.b16 %v205
    %v953 = vunpack.c.l.b16 %v206
    %v954 = vunpack.c.h.b16 %v206
    %v955 = vunpack.c.l.b16 %v207
    %v956 = vunpack.c.h.b16 %v207
    %v957 = vunpack.c.l.b16 %v208
    %v958 = vunpack.c.h.b16 %v208
    %v959 = vunpack.c.l.b16 %v209
    %v960 = vunpack.c.h.b16 %v209
    %v961 = vunpack.c.l.b16 %v210
    %v962 = vunpack.c.h.b16 %v210
    %v963 = vunpack.c.l.b16 %v211
    %v964 = vunpack.c.h.b16 %v211
    %v965 = vunpack.c.l.b16 %v212
    %v966 = vunpack.c.h.b16 %v212
    %v967 = vunpack.c.l.b16 %v213
    %v968 = vunpack.c.h.b16 %v213
    %v969 = vunpack.c.l.b16 %v214
    %v970 = vunpack.c.h.b16 %v214
    %v971 = vunpack.c.l.b16 %v215
    %v972 = vunpack.c.h.b16 %v215
    %v973 = vunpack.c.l.b16 %v216
    %v974 = vunpack.c.h.b16 %v216
    %v975 = vunpack.c.l.b16 %v217
    %v976 = vunpack.c.h.b16 %v217
    %v977 = vunpack.c.l.b16 %v218
    %v978 = vunpack.c.h.b16 %v218
    %v979 = vunpack.c.l.b16 %v219
    %v980 = vunpack.c.h.b16 %v219
    %v981 = vunpack.c.l.b16 %v220
    %v982 = vunpack.c.h.b16 %v220
    %v983 = vunpack.c.l.b16 %v221
    %v984 = vunpack.c.h.b16 %v221
    %v985 = vunpack.c.l.b16 %v222
    %v986 = vunpack.c.h.b16 %v222
    %v987 = vunpack.c.l.b16 %v223
    %v988 = vunpack.c.h.b16 %v223
    %v989 = vunpack.c.l.b16 %v224
    %v990 = vunpack.c.h.b16 %v224
    %v991 = vunpack.c.l.b16 %v225
    %v992 = vunpack.c.h.b16 %v225
    %v993 = vunpack.c.l.b16 %v226
    %v994 = vunpack.c.h.b16 %v226
    %v995 = vunpack.c.l.b16 %v227
    %v996 = vunpack.c.h.b16 %v227
    %v997 = vunpack.c.l.b16 %v228
    %v998 = vunpack.c.h.b16 %v228
    %v999 = vunpack.c.l.b16 %v229
    %v1000 = vunpack.c.h.b16 %v229
    %v1001 = vunpack.c.l.b16 %v230
    %v1002 = vunpack.c.h.b16 %v230
    %v1003 = vunpack.c.l.b16 %v231
    %v1004 = vunpack.c.h.b16 %v231
    %v1005 = vunpack.c.l.b16 %v232
    %v1006 = vunpack.c.h.b16 %v232
    %v1007 = vunpack.c.l.b16 %v233
    %v1008 = vunpack.c.h.b16 %v233
    %v1009 = vunpack.c.l.b16 %v234
    %v1010 = vunpack.c.h.b16 %v234
    %v1011 = vunpack.c.l.b16 %v235
    %v1012 = vunpack.c.h.b16 %v235
    %v1013 = vunpack.c.l.b16 %v236
    %v1014 = vunpack.c.h.b16 %v236
    %v1015 = vunpack.c.l.b16 %v237
    %v1016 = vunpack.c.h.b16 %v237
    %v1017 = vunpack.c.l.b16 %v238
    %v1018 = vunpack.c.h.b16 %v238
    %v1019 = vunpack.c.l.b16 %v239
    %v1020 = vunpack.c.h.b16 %v239
    %v1021 = vunpack.c.l.b16 %v240
    %v1022 = vunpack.c.h.b16 %v240
    %v1023 = vunpack.c.l.b16 %v241
    %v1024 = vunpack.c.h.b16 %v241
    %v1025 = vunpack.c.l.b16 %v242
    %v1026 = vunpack.c.h.b16 %v242
    %v1027 = vunpack.c.l.b16 %v243
    %v1028 = vunpack.c.h.b16 %v243
    %v1029 = vunpack.c.l.b16 %v244
    %v1030 = vunpack.c.h.b16 %v244
    %v1031 = vunpack.c.l.b16 %v245
    %v1032 = vunpack.c.h.b16 %v245
    %v1033 = vunpack.c.l.b16 %v246
    %v1034 = vunpack.c.h.b16 %v246
    %v1035 = vunpack.c.l.b16 %v247
    %v1036 = vunpack.c.h.b16 %v247
    %v1037 = vunpack.c.l.b16 %v248
    %v1038 = vunpack.c.h.b16 %v248
    %v1039 = vunpack.c.l.b16 %v249
    %v1040 = vunpack.c.h.b16 %v249
    %v1041 = vunpack.c.l.b16 %v250
    %v1042 = vunpack.c.h.b16 %v250
    %v1043 = vunpack.c.l.b16 %v251
    %v1044 = vunpack.c.h.b16 %v251
    %v1045 = vunpack.c.l.b16 %v252
    %v1046 = vunpack.c.h.b16 %v252
    %v1047 = vunpack.c.l.b16 %v253
    %v1048 = vunpack.c.h.b16 %v253
    %v1049 = vunpack.c.l.b16 %v254
    %v1050 = vunpack.c.h.b16 %v254
    %v1051 = vunpack.c.l.b16 %v255
    %v1052 = vunpack.c.h.b16 %v255
    %v1053 = vunpack.c.l.b16 %v256
    %v1054 = vunpack.c.h.b16 %v256
    %v1055 = vunpack.c.l.b16 %v257
    %v1056 = vunpack.c.h.b16 %v257
    %v1057 = vunpack.c.l.b16 %v258
    %v1058 = vunpack.c.h.b16 %v258
    %v1059 = vunpack.c.l.b16 %v259
    %v1060 = vunpack.c.h.b16 %v259
    %v1061 = vunpack.c.l.b16 %v260
    %v1062 = vunpack.c.h.b16 %v260
    %v1063 = vunpack.c.l.b16 %v261
    %v1064 = vunpack.c.h.b16 %v261
    %v1065 = vunpack.c.l.b16 %v262
    %v1066 = vunpack.c.h.b16 %v262
    %v1067 = vunpack.c.l.b16 %v263
    %v1068 = vunpack.c.h.b16 %v263
    %v1069 = vunpack.c.l.b16 %v264
    %v1070 = vunpack.c.h.b16 %v264
    %v1071 = vunpack.c.l.b16 %v265
    %v1072 = vunpack.c.h.b16 %v265
    %v1073 = vunpack.c.l.b16 %v266
    %v1074 = vunpack.c.h.b16 %v266
    %v1075 = vunpack.c.l.b16 %v267
    %v1076 = vunpack.c.h.b16 %v267
    %v1077 = vunpack.c.l.b16 %v268
    %v1078 = vunpack.c.h.b16 %v268
    %v1079 = vunpack.c.l.b16 %v269
    %v1080 = vunpack.c.h.b16 %v269
    %v1081 = vunpack.c.l.b16 %v270
    %v1082 = vunpack.c.h.b16 %v270
    %v1083 = vunpack.c.l.b16 %v271
    %v1084 = vunpack.c.h.b16 %v271
    %v1085 = vunpack.c.l.b16 %v272
    %v1086 = vunpack.c.h.b16 %v272
    %v1087 = vunpack.c.l.b16 %v273
    %v1088 = vunpack.c.h.b16 %v273
    %v1089 = vunpack.c.l.b16 %v274
    %v1090 = vunpack.c.h.b16 %v274
    %v1091 = vunpack.c.l.b16 %v275
    %v1092 = vunpack.c.h.b16 %v275
    %v1093 = vunpack.c.l.b16 %v276
    %v1094 = vunpack.c.h.b16 %v276
    %v1095 = vunpack.c.l.b16 %v277
    %v1096 = vunpack.c.h.b16 %v277
    %v1097 = vunpack.c.l.b16 %v278
    %v1098 = vunpack.c.h.b16 %v278
    %v1099 = vunpack.c.l.b16 %v279
    %v1100 = vunpack.c.h.b16 %v279
    %v1101 = vunpack.c.l.b16 %v280
    %v1102 = vunpack.c.h.b16 %v280
    %v1103 = vunpack.c.l.b16 %v281
    %v1104 = vunpack.c.h.b16 %v281
    %v1105 = vunpack.c.l.b16 %v282
    %v1106 = vunpack.c.h.b16 %v282
    %v1107 = vunpack.c.l.b16 %v283
    %v1108 = vunpack.c.h.b16 %v283
    %v1109 = vunpack.c.l.b16 %v284
    %v1110 = vunpack.c.h.b16 %v284
    %v1111 = vunpack.c.l.b16 %v285
    %v1112 = vunpack.c.h.b16 %v285
    %v1113 = vunpack.c.l.b16 %v286
    %v1114 = vunpack.c.h.b16 %v286
    %v1115 = vunpack.c.l.b16 %v287
    %v1116 = vunpack.c.h.b16 %v287
    %v1117 = vunpack.c.l.b16 %v288
    %v1118 = vunpack.c.h.b16 %v288
    %v1119 = vunpack.c.l.b16 %v289
    %v1120 = vunpack.c.h.b16 %v289
    %v1121 = vunpack.c.l.b16 %v290
    %v1122 = vunpack.c.h.b16 %v290
    %v1123 = vunpack.c.l.b16 %v291
    %v1124 = vunpack.c.h.b16 %v291
    %v1125 = vunpack.c.l.b16 %v292
    %v1126 = vunpack.c.h.b16 %v292
    %v1127 = vunpack.c.l.b16 %v293
    %v1128 = vunpack.c.h.b16 %v293
    %v1129 = vunpack.c.l.b16 %v294
    %v1130 = vunpack.c.h.b16 %v294
    %v1131 = vunpack.c.l.b16 %v295
    %v1132 = vunpack.c.h.b16 %v295
    %v1133 = vunpack.c.l.b16 %v296
    %v1134 = vunpack.c.h.b16 %v296
    %v1135 = vunpack.c.l.b16 %v297
    %v1136 = vunpack.c.h.b16 %v297
    %v1137 = vunpack.c.l.b16 %v298
    %v1138 = vunpack.c.h.b16 %v298
    %v1139 = vunpack.c.l.b16 %v299
    %v1140 = vunpack.c.h.b16 %v299
    %v1141 = vunpack.c.l.b16 %v300
    %v1142 = vunpack.c.h.b16 %v300
    %v1143 = vunpack.c.l.b16 %v301
    %v1144 = vunpack.c.h.b16 %v301
    %v1145 = vunpack.c.l.b16 %v302
    %v1146 = vunpack.c.h.b16 %v302
    %v1147 = vunpack.c.l.b16 %v303
    %v1148 = vunpack.c.h.b16 %v303
    %v1149 = vunpack.c.l.b16 %v304
    %v1150 = vunpack.c.h.b16 %v304
    %v1151 = vunpack.c.l.b16 %v305
    %v1152 = vunpack.c.h.b16 %v305
    %v1153 = vunpack.c.l.b16 %v306
    %v1154 = vunpack.c.h.b16 %v306
    %v1155 = vunpack.c.l.b16 %v307
    %v1156 = vunpack.c.h.b16 %v307
    %v1157 = vunpack.c.l.b16 %v308
    %v1158 = vunpack.c.h.b16 %v308
    %v1159 = vunpack.c.l.b16 %v309
    %v1160 = vunpack.c.h.b16 %v309
    %v1161 = vunpack.c.l.b16 %v310
    %v1162 = vunpack.c.h.b16 %v310
    %v1163 = vunpack.c.l.b16 %v311
    %v1164 = vunpack.c.h.b16 %v311
    %v1165 = vunpack.c.l.b16 %v312
    %v1166 = vunpack.c.h.b16 %v312
    %v1167 = vunpack.c.l.b16 %v313
    %v1168 = vunpack.c.h.b16 %v313
    %v1169 = vunpack.c.l.b16 %v314
    %v1170 = vunpack.c.h.b16 %v314
    %v1171 = vunpack.c.l.b16 %v315
    %v1172 = vunpack.c.h.b16 %v315
    %v1173 = vunpack.c.l.b16 %v316
    %v1174 = vunpack.c.h.b16 %v316
    %v1175 = vunpack.c.l.b16 %v317
    %v1176 = vunpack.c.h.b16 %v317
    %v1177 = vunpack.c.l.b16 %v318
    %v1178 = vunpack.c.h.b16 %v318
    %v1179 = vunpack.c.l.b16 %v319
    %v1180 = vunpack.c.h.b16 %v319
    %v1181 = vunpack.c.l.b16 %v320
    %v1182 = vunpack.c.h.b16 %v320
    %v1183 = vunpack.c.l.b16 %v321
    %v1184 = vunpack.c.h.b16 %v321
    %v1185 = vunpack.c.l.b16 %v322
    %v1186 = vunpack.c.h.b16 %v322
    %v1187 = vunpack.c.l.b16 %v323
    %v1188 = vunpack.c.h.b16 %v323
    %v1189 = vunpack.c.l.b16 %v324
    %v1190 = vunpack.c.h.b16 %v324
    %v1191 = vunpack.c.l.b16 %v325
    %v1192 = vunpack.c.h.b16 %v325
    %v1193 = vunpack.c.l.b16 %v326
    %v1194 = vunpack.c.h.b16 %v326
    %v1195 = vunpack.c.l.b16 %v327
    %v1196 = vunpack.c.h.b16 %v327
    %v1197 = vunpack.c.l.b16 %v328
    %v1198 = vunpack.c.h.b16 %v328
    %v1199 = vunpack.c.l.b16 %v329
    %v1200 = vunpack.c.h.b16 %v329
    %v1201 = vunpack.c.l.b16 %v330
    %v1202 = vunpack.c.h.b16 %v330
    %v1203 = vunpack.c.l.b16 %v331
    %v1204 = vunpack.c.h.b16 %v331
    %v1205 = vunpack.c.l.b16 %v332
    %v1206 = vunpack.c.h.b16 %v332
    %v1207 = vunpack.c.l.b16 %v333
    %v1208 = vunpack.c.h.b16 %v333
    %v1209 = vunpack.c.l.b16 %v334
    %v1210 = vunpack.c.h.b16 %v334
    %v1211 = vunpack.c.l.b16 %v335
    %v1212 = vunpack.c.h.b16 %v335
    %v1213 = vunpack.c.l.b16 %v336
    %v1214 = vunpack.c.h.b16 %v336
    %v1215 = vunpack.c.l.b16 %v337
    %v1216 = vunpack.c.h.b16 %v337
    %v1217 = vunpack.c.l.b16 %v338
    %v1218 = vunpack.c.h.b16 %v338
    %v1219 = vunpack.c.l.b16 %v339
    %v1220 = vunpack.c.h.b16 %v339
    %v1221 = vunpack.c.l.b16 %v340
    %v1222 = vunpack.c.h.b16 %v340
    %v1223 = vunpack.c.l.b16 %v341
    %v1224 = vunpack.c.h.b16 %v341
    %v1225 = vunpack.c.l.b16 %v342
    %v1226 = vunpack.c.h.b16 %v342
    %v1227 = vunpack.c.l.b16 %v343
    %v1228 = vunpack.c.h.b16 %v343
    %v1229 = vunpack.c.l.b16 %v344
    %v1230 = vunpack.c.h.b16 %v344
    %v1231 = vunpack.c.l.b16 %v345
    %v1232 = vunpack.c.h.b16 %v345
    %v1233 = vunpack.c.l.b16 %v346
    %v1234 = vunpack.c.h.b16 %v346
    %v1235 = vunpack.c.l.b16 %v347
    %v1236 = vunpack.c.h.b16 %v347
    %v1237 = vunpack.c.l.b16 %v348
    %v1238 = vunpack.c.h.b16 %v348
    %v1239 = vunpack.c.l.b16 %v349
    %v1240 = vunpack.c.h.b16 %v349
    %v1241 = vunpack.c.l.b16 %v350
    %v1242 = vunpack.c.h.b16 %v350
    %v1243 = vunpack.c.l.b16 %v351
    %v1244 = vunpack.c.h.b16 %v351
    %v1245 = vunpack.c.l.b16 %v352
    %v1246 = vunpack.c.h.b16 %v352
    %v1247 = vunpack.c.l.b16 %v353
    %v1248 = vunpack.c.h.b16 %v353
    %v1249 = vunpack.c.l.b16 %v354
    %v1250 = vunpack.c.h.b16 %v354
    %v1251 = vunpack.c.l.b16 %v355
    %v1252 = vunpack.c.h.b16 %v355
    %v1253 = vunpack.c.l.b16 %v356
    %v1254 = vunpack.c.h.b16 %v356
    %v1255 = vunpack.c.l.b16 %v357
    %v1256 = vunpack.c.h.b16 %v357
    %v1257 = vunpack.c.l.b16 %v358
    %v1258 = vunpack.c.h.b16 %v358
    %v1259 = vunpack.c.l.b16 %v359
    %v1260 = vunpack.c.h.b16 %v359
    %v1261 = vunpack.c.l.b16 %v360
    %v1262 = vunpack.c.h.b16 %v360
    %v1263 = vunpack.c.l.b16 %v361
    %v1264 = vunpack.c.h.b16 %v361
    %v1265 = vunpack.c.l.b16 %v362
    %v1266 = vunpack.c.h.b16 %v362
    %v1267 = vunpack.c.l.b16 %v363
    %v1268 = vunpack.c.h.b16 %v363
    %v1269 = vunpack.c.l.b16 %v364
    %v1270 = vunpack.c.h.b16 %v364
    %v1271 = vunpack.c.l.b16 %v365
    %v1272 = vunpack.c.h.b16 %v365
    %v1273 = vunpack.c.l.b16 %v366
    %v1274 = vunpack.c.h.b16 %v366
    %v1275 = vunpack.c.l.b16 %v367
    %v1276 = vunpack.c.h.b16 %v367
    %v1277 = vunpack.c.l.b16 %v368
    %v1278 = vunpack.c.h.b16 %v368
    %v1279 = vunpack.c.l.b16 %v369
    %v1280 = vunpack.c.h.b16 %v369
    %v1281 = vunpack.c.l.b16 %v370
    %v1282 = vunpack.c.h.b16 %v370
    %v1283 = vunpack.c.l.b16 %v371
    %v1284 = vunpack.c.h.b16 %v371
    %v1285 = vunpack.c.l.b16 %v372
    %v1286 = vunpack.c.h.b16 %v372
    %v1287 = vunpack.c.l.b16 %v373
    %v1288 = vunpack.c.h.b16 %v373
    %v1289 = vunpack.c.l.b16 %v374
    %v1290 = vunpack.c.h.b16 %v374
    %v1291 = vunpack.c.l.b16 %v375
    %v1292 = vunpack.c.h.b16 %v375
    %v1293 = vpack.c.b16 %v723, %v717
    %v1294 = vpack.c.b16 %v724, %v718
    %v1295 = vpack.c.b16 %v725, %v719
    %v1296 = vpack.c.b16 %v726, %v720
    %v1297 = vpack.c.b16 %v727, %v721
    %v1298 = vpack.c.b16 %v728, %v722
    %v1299 = vpack.c.b16 %v735, %v729
    %v1300 = vpack.c.b16 %v736, %v730
    %v1301 = vpack.c.b16 %v737, %v731
    %v1302 = vpack.c.b16 %v738, %v732
    %v1303 = vpack.c.b16 %v739, %v733
    %v1304 = vpack.c.b16 %v740, %v734
    %v1305 = vpack.c.b16 %v747, %v741
    %v1306 = vpack.c.b16 %v748, %v742
    %v1307 = vpack.c.b16 %v749, %v743
    %v1308 = vpack.c.b16 %v750, %v744
    %v1309 = vpack.c.b16 %v751, %v745
    %v1310 = vpack.c.b16 %v752, %v746
    %v1311 = vpack.c.b16 %v759, %v753
    %v1312 = vpack.c.b16 %v760, %v754
    %v1313 = vpack.c.b16 %v761, %v755
    %v1314 = vpack.c.b16 %v762, %v756
    %v1315 = vpack.c.b16 %v763, %v757
    %v1316 = vpack.c.b16 %v764, %v758
    %v1317 = vpack.c.b16 %v771, %v765
    %v1318 = vpack.c.b16 %v772, %v766
    %v1319 = vpack.c.b16 %v773, %v767
    %v1320 = vpack.c.b16 %v774, %v768
    %v1321 = vpack.c.b16 %v775, %v769
    %v1322 = vpack.c.b16 %v776, %v770
    %v1323 = vpack.c.b16 %v783, %v777
    %v1324 = vpack.c.b16 %v784, %v778
    %v1325 = vpack.c.b16 %v785, %v779
    %v1326 = vpack.c.b16 %v786, %v780
    %v1327 = vpack.c.b16 %v787, %v781
    %v1328 = vpack.c.b16 %v788, %v782
    %v1329 = vpack.c.b16 %v795, %v789
    %v1330 = vpack.c.b16 %v796, %v790
    %v1331 = vpack.c.b16 %v797, %v791
    %v1332 = vpack.c.b16 %v798, %v792
    %v1333 = vpack.c.b16 %v799, %v793
    %v1334 = vpack.c.b16 %v800, %v794
    %v1335 = vpack.c.b16 %v807, %v801
    %v1336 = vpack.c.b16 %v808, %v802
    %v1337 = vpack.c.b16 %v809, %v803
    %v1338 = vpack.c.b16 %v810, %v804
    %v1339 = vpack.c.b16 %v811, %v805
    %v1340 = vpack.c.b16 %v812, %v806
    %v1341 = vpack.c.b16 %v819, %v813
    %v1342 = vpack.c.b16 %v820, %v814
    %v1343 = vpack.c.b16 %v821, %v815
    %v1344 = vpack.c.b16 %v822, %v816
    %v1345 = vpack.c.b16 %v823, %v817
    %v1346 = vpack.c.b16 %v824, %v818
    %v1347 = vpack.c.b16 %v831, %v825
    %v1348 = vpack.c.b16 %v832, %v826
    %v1349 = vpack.c.b16 %v833, %v827
    %v1350 = vpack.c.b16 %v834, %v828
    %v1351 = vpack.c.b16 %v835, %v829
    %v1352 = vpack.c.b16 %v836, %v830
    %v1353 = vpack.c.b16 %v843, %v837
    %v1354 = vpack.c.b16 %v844, %v838
    %v1355 = vpack.c.b16 %v845, %v839
    %v1356 = vpack.c.b16 %v846, %v840
    %v1357 = vpack.c.b16 %v847, %v841
    %v1358 = vpack.c.b16 %v848, %v842
    %v1359 = vpack.c.b16 %v855, %v849
    %v1360 = vpack.c.b16 %v856, %v850
    %v1361 = vpack.c.b16 %v857, %v851
    %v1362 = vpack.c.b16 %v858, %v852
    %v1363 = vpack.c.b16 %v859, %v853
    %v1364 = vpack.c.b16 %v860, %v854
    %v1365 = vpack.c.b16 %v867, %v861
    %v1366 = vpack.c.b16 %v868, %v862
    %v1367 = vpack.c.b16 %v869, %v863
    %v1368 = vpack.c.b16 %v870, %v864
    %v1369 = vpack.c.b16 %v871, %v865
    %v1370 = vpack.c.b16 %v872, %v866
    %v1371 = vpack.c.b16 %v879, %v873
    %v1372 = vpack.c.b16 %v880, %v874
    %v1373 = vpack.c.b16 %v881, %v875
    %v1374 = vpack.c.b16 %v882, %v876
    %v1375 = vpack.c.b16 %v883, %v877
    %v1376 = vpack.c.b16 %v884, %v878
    %v1377 = vpack.c.b16 %v891, %v885
    %v1378 = vpack.c.b16 %v892, %v886
    %v1379 = vpack.c.b16 %v893, %v887
    %v1380 = vpack.c.b16 %v894, %v888
    %v1381 = vpack.c.b16 %v895, %v889
    %v1382 = vpack.c.b16 %v896, %v890
    %v1383 = vpack.c.b16 %v903, %v897
    %v1384 = vpack.c.b16 %v904, %v898
    %v1385 = vpack.c.b16 %v905, %v899
    %v1386 = vpack.c.b16 %v906, %v900
    %v1387 = vpack.c.b16 %v907, %v901
    %v1388 = vpack.c.b16 %v908, %v902
    %v1389 = vpack.c.b16 %v915, %v909
    %v1390 = vpack.c.b16 %v916, %v910
    %v1391 = vpack.c.b16 %v917, %v911
    %v1392 = vpack.c.b16 %v918, %v912
    %v1393 = vpack.c.b16 %v919, %v913
    %v1394 = vpack.c.b16 %v920, %v914
    %v1395 = vpack.c.b16 %v927, %v921
    %v1396 = vpack.c.b16 %v928, %v922
    %v1397 = vpack.c.b16 %v929, %v923
    %v1398 = vpack.c.b16 %v930, %v924
    %v1399 = vpack.c.b16 %v931, %v925
    %v1400 = vpack.c.b16 %v932, %v926
    %v1401 = vpack.c.b16 %v939, %v933
    %v1402 = vpack.c.b16 %v940, %v934
    %v1403 = vpack.c.b16 %v941, %v935
    %v1404 = vpack.c.b16 %v942, %v936
    %v1405 = vpack.c.b16 %v943, %v937
    %v1406 = vpack.c.b16 %v944, %v938
    %v1407 = vpack.c.b16 %v951, %v945
    %v1408 = vpack.c.b16 %v952, %v946
    %v1409 = vpack.c.b16 %v953, %v947
    %v1410 = vpack.c.b16 %v954, %v948
    %v1411 = vpack.c.b16 %v955, %v949
    %v1412 = vpack.c.b16 %v956, %v950
    %v1413 = vpack.c.b16 %v963, %v957
    %v1414 = vpack.c.b16 %v964, %v958
    %v1415 = vpack.c.b16 %v965, %v959
    %v1416 = vpack.c.b16 %v966, %v960
    %v1417 = vpack.c.b16 %v967, %v961
    %v1418 = vpack.c.b16 %v968, %v962
    %v1419 = vpack.c.b16 %v975, %v969
    %v1420 = vpack.c.b16 %v976, %v970
    %v1421 = vpack.c.b16 %v977, %v971
    %v1422 = vpack.c.b16 %v978, %v972
    %v1423 = vpack.c.b16 %v979, %v973
    %v1424 = vpack.c.b16 %v980, %v974
    %v1425 = vpack.c.b16 %v987, %v981
    %v1426 = vpack.c.b16 %v988, %v982
    %v1427 = vpack.c.b16 %v989, %v983
    %v1428 = vpack.c.b16 %v990, %v984
    %v1429 = vpack.c.b16 %v991, %v985
    %v1430 = vpack.c.b16 %v992, %v986
    %v1431 = vpack.c.b16 %v999, %v993
    %v1432 = vpack.c.b16 %v1000, %v994
    %v1433 = vpack.c.b16 %v1001, %v995
    %v1434 = vpack.c.b16 %v1002, %v996
    %v1435 = vpack.c.b16 %v1003, %v997
    %v1436 = vpack.c.b16 %v1004, %v998
    %v1437 = vpack.c.b16 %v1011, %v1005
    %v1438 = vpack.c.b16 %v1012, %v1006
    %v1439 = vpack.c.b16 %v1013, %v1007
    %v1440 = vpack.c.b16 %v1014, %v1008
    %v1441 = vpack.c.b16 %v1015, %v1009
    %v1442 = vpack.c.b16 %v1016, %v1010
    %v1443 = vpack.c.b16 %v1023, %v1017
    %v1444 = vpack.c.b16 %v1024, %v1018
    %v1445 = vpack.c.b16 %v1025, %v1019
    %v1446 = vpack.c.b16 %v1026, %v1020
    %v1447 = vpack.c.b16 %v1027, %v1021
    %v1448 = vpack.c.b16 %v1028, %v1022
    %v1449 = vpack.c.b16 %v1035, %v1029
    %v1450 = vpack.c.b16 %v1036, %v1030
    %v1451 = vpack.c.b16 %v1037, %v1031
    %v1452 = vpack.c.b16 %v1038, %v1032
    %v1453 = vpack.c.b16 %v1039, %v1033
    %v1454 = vpack.c.b16 %v1040, %v1034
    %v1455 = vpack.c.b16 %v1047, %v1041
    %v1456 = vpack.c.b16 %v1048, %v1042
    %v1457 = vpack.c.b16 %v1049, %v1043
    %v1458 = vpack.c.b16 %v1050, %v1044
    %v1459 = vpack.c.b16 %v1051, %v1045
    %v1460 = vpack.c.b16 %v1052, %v1046
    %v1461 = vpack.c.b16 %v1059, %v1053
    %v1462 = vpack.c.b16 %v1060, %v1054
    %v1463 = vpack.c.b16 %v1061, %v1055
    %v1464 = vpack.c.b16 %v1062, %v1056
    %v1465 = vpack.c.b16 %v1063, %v1057
    %v1466 = vpack.c.b16 %v1064, %v1058
    %v1467 = vpack.c.b16 %v1071, %v1065
    %v1468 = vpack.c.b16 %v1072, %v1066
    %v1469 = vpack.c.b16 %v1073, %v1067
    %v1470 = vpack.c.b16 %v1074, %v1068
    %v1471 = vpack.c.b16 %v1075, %v1069
    %v1472 = vpack.c.b16 %v1076, %v1070
    %v1473 = vpack.c.b16 %v1083, %v1077
    %v1474 = vpack.c.b16 %v1084, %v1078
    %v1475 = vpack.c.b16 %v1085, %v1079
    %v1476 = vpack.c.b16 %v1086, %v1080
    %v1477 = vpack.c.b16 %v1087, %v1081
    %v1478 = vpack.c.b16 %v1088, %v1082
    %v1479 = vpack.c.b16 %v1095, %v1089
    %v1480 = vpack.c.b16 %v1096, %v1090
    %v1481 = vpack.c.b16 %v1097, %v1091
    %v1482 = vpack.c.b16 %v1098, %v1092
    %v1483 = vpack.c.b16 %v1099, %v1093
    %v1484 = vpack.c.b16 %v1100, %v1094
    %v1485 = vpack.c.b16 %v1107, %v1101
    %v1486 = vpack.c.b16 %v1108, %v1102
    %v1487 = vpack.c.b16 %v1109, %v1103
    %v1488 = vpack.c.b16 %v1110, %v1104
    %v1489 = vpack.c.b16 %v1111, %v1105
    %v1490 = vpack.c.b16 %v1112, %v1106
    %v1491 = vpack.c.b16 %v1119, %v1113
    %v1492 = vpack.c.b16 %v1120, %v1114
    %v1493 = vpack.c.b16 %v1121, %v1115
    %v1494 = vpack.c.b16 %v1122, %v1116
    %v1495 = vpack.c.b16 %v1123, %v1117
    %v1496 = vpack.c.b16 %v1124, %v1118
    %v1497 = vpack.c.b16 %v1131, %v1125
    %v1498 = vpack.c.b16 %v1132, %v1126
    %v1499 = vpack.c.b16 %v1133, %v1127
    %v1500 = vpack.c.b16 %v1134, %v1128
    %v1501 = vpack.c.b16 %v1135, %v1129
    %v1502 = vpack.c.b16 %v1136, %v1130
    %v1503 = vpack.c.b16 %v1143, %v1137
    %v1504 = vpack.c.b16 %v1144, %v1138
    %v1505 = vpack.c.b16 %v1145, %v1139
    %v1506 = vpack.c.b16 %v1146, %v1140
    %v1507 = vpack.c.b16 %v1147, %v1141
    %v1508 = vpack.c.b16 %v1148, %v1142
    %v1509 = vpack.c.b16 %v1155, %v1149
    %v1510 = vpack.c.b16 %v1156, %v1150
    %v1511 = vpack.c.b16 %v1157, %v1151
    %v1512 = vpack.c.b16 %v1158, %v1152
    %v1513 = vpack.c.b16 %v1159, %v1153
    %v1514 = vpack.c.b16 %v1160, %v1154
    %v1515 = vpack.c.b16 %v1167, %v1161
    %v1516 = vpack.c.b16 %v1168, %v1162
    %v1517 = vpack.c.b16 %v1169, %v1163
    %v1518 = vpack.c.b16 %v1170, %v1164
    %v1519 = vpack.c.b16 %v1171, %v1165
    %v1520 = vpack.c.b16 %v1172, %v1166
    %v1521 = vpack.c.b16 %v1179, %v1173
    %v1522 = vpack.c.b16 %v1180, %v1174
    %v1523 = vpack.c.b16 %v1181, %v1175
    %v1524 = vpack.c.b16 %v1182, %v1176
    %v1525 = vpack.c.b16 %v1183, %v1177
    %v1526 = vpack.c.b16 %v1184, %v1178
    %v1527 = vpack.c.b16 %v1191, %v1185
    %v1528 = vpack.c.b16 %v1192, %v1186
    %v1529 = vpack.c.b16 %v1193, %v1187
    %v1530 = vpack.c.b16 %v1194, %v1188
    %v1531 = vpack.c.b16 %v1195, %v1189
    %v1532 = vpack.c.b16 %v1196, %v1190
    %v1533 = vpack.c.b16 %v1203, %v1197
    %v1534 = vpack.c.b16 %v1204, %v1198
    %v1535 = vpack.c.b16 %v1205, %v1199
    %v1536 = vpack.c.b16 %v1206, %v1200
    %v1537 = vpack.c.b16 %v1207, %v1201
    %v1538 = vpack.c.b16 %v1208, %v1202
    %v1539 = vpack.c.b16 %v1215, %v1209
    %v1540 = vpack.c.b16 %v1216, %v1210
    %v1541 = vpack.c.b16 %v1217, %v1211
    %v1542 = vpack.c.b16 %v1218, %v1212
    %v1543 = vpack.c.b16 %v1219, %v1213
    %v1544 = vpack.c.b16 %v1220, %v1214
    %v1545 = vpack.c.b16 %v1227, %v1221
    %v1546 = vpack.c.b16 %v1228, %v1222
    %v1547 = vpack.c.b16 %v1229, %v1223
    %v1548 = vpack.c.b16 %v1230, %v1224
    %v1549 = vpack.c.b16 %v1231, %v1225
    %v1550 = vpack.c.b16 %v1232, %v1226
    %v1551 = vpack.c.b16 %v1239, %v1233
    %v1552 = vpack.c.b16 %v1240, %v1234
    %v1553 = vpack.c.b16 %v1241, %v1235
    %v1554 = vpack.c.b16 %v1242, %v1236
    %v1555 = vpack.c.b16 %v1243, %v1237
    %v1556 = vpack.c.b16 %v1244, %v1238
    %v1557 = vpack.c.b16 %v1251, %v1245
    %v1558 = vpack.c.b16 %v1252, %v1246
    %v1559 = vpack.c.b16 %v1253, %v1247
    %v1560 = vpack.c.b16 %v1254, %v1248
    %v1561 = vpack.c.b16 %v1255, %v1249
    %v1562 = vpack.c.b16 %v1256, %v1250
    %v1563 = vpack.c.b16 %v1263, %v1257
    %v1564 = vpack.c.b16 %v1264, %v1258
    %v1565 = vpack.c.b16 %v1265, %v1259
    %v1566 = vpack.c.b16 %v1266, %v1260
    %v1567 = vpack.c.b16 %v1267, %v1261
    %v1568 = vpack.c.b16 %v1268, %v1262
    %v1569 = vpack.c.b16 %v1275, %v1269
    %v1570 = vpack.c.b16 %v1276, %v1270
    %v1571 = vpack.c.b16 %v1277, %v1271
    %v1572 = vpack.c.b16 %v1278, %v1272
    %v1573 = vpack.c.b16 %v1279, %v1273
    %v1574 = vpack.c.b16 %v1280, %v1274
    %v1575 = vpack.c.b16 %v1287, %v1281
    %v1576 = vpack.c.b16 %v1288, %v1282
    %v1577 = vpack.c.b16 %v1289, %v1283
    %v1578 = vpack.c.b16 %v1290, %v1284
    %v1579 = vpack.c.b16 %v1291, %v1285
    %v1580 = vpack.c.b16 %v1292, %v1286
    %1869 = vmatprep.subr.bf16.mxu0 %v1336
    %1870 = vmatpush1.bf16.msra.mxu0 %v1335
    %1871 = vmatprep.subr.bf16.mxu0 %v1330
    %1872 = vmatpush1.bf16.msra.mxu0 %v1329
    %1873 = vmatprep.subr.bf16.mxu0 %v1324
    %1874 = vmatpush1.bf16.msra.mxu0 %v1323
    %1875 = vmatprep.subr.bf16.mxu0 %v1318
    %1876 = vmatpush1.bf16.msra.mxu0 %v1317
    %1877 = vmatprep.subr.bf16.mxu0 %v1312
    %1878 = vmatpush1.bf16.msra.mxu0 %v1311
    %1879 = vmatprep.subr.bf16.mxu0 %v1306
    %1880 = vmatpush1.bf16.msra.mxu0 %v1305
    %1881 = vmatprep.subr.bf16.mxu0 %v1300
    %1882 = vmatpush1.bf16.msra.mxu0 %v1299
    %1883 = vmatprep.subr.bf16.mxu0 %v1294
    %1884 = vmatpush1.bf16.msra.mxu0 %v1293
    %1885 = vmatprep.subr.bf16.mxu0 %v1384
    %1886 = vmatpush2.bf16.msra.mxu0 %v1383
    %1887 = vmatprep.subr.bf16.mxu0 %v1378
    %1888 = vmatpush2.bf16.msra.mxu0 %v1377
    %1889 = vmatprep.subr.bf16.mxu0 %v1372
    %1890 = vmatpush2.bf16.msra.mxu0 %v1371
    %1891 = vmatprep.subr.bf16.mxu0 %v1366
    %1892 = vmatpush2.bf16.msra.mxu0 %v1365
    %1893 = vmatprep.subr.bf16.mxu0 %v1360
    %1894 = vmatpush2.bf16.msra.mxu0 %v1359
    %1895 = vmatprep.subr.bf16.mxu0 %v1354
    %1896 = vmatpush2.bf16.msra.mxu0 %v1353
    %1897 = vmatprep.subr.bf16.mxu0 %v1348
    %1898 = vmatpush2.bf16.msra.mxu0 %v1347
    %1899 = vmatprep.subr.bf16.mxu0 %v1342
    %1900 = vmatpush2.bf16.msra.mxu0 %v1341
    %1901 = vmatprep.mubr.bf16.mxu0 %v418
    %1902 = vmatmul.mubr.bf16.gmra.mxu0 %v417
    %v1903 = vpop.f32.mrf.mxu0
    %v1904 = vadd.f32 %v381, %v1903
    %v1905 = vpop.f32.mrf.mxu0
    %v1906 = vadd.f32 %v385, %v1905
    %v1907 = vpop.f32.mrf.mxu0
    %v1908 = vpop.f32.mrf.mxu0
    %1909 = vdwg.mxu0
    %1910 = vmatprep.subr.bf16.mxu0 %v1432
    %1911 = vmatpush1.bf16.msra.mxu0 %v1431
    %1912 = vmatprep.subr.bf16.mxu0 %v1426
    %1913 = vmatpush1.bf16.msra.mxu0 %v1425
    %1914 = vmatprep.subr.bf16.mxu0 %v1420
    %1915 = vmatpush1.bf16.msra.mxu0 %v1419
    %1916 = vmatprep.subr.bf16.mxu0 %v1414
    %1917 = vmatpush1.bf16.msra.mxu0 %v1413
    %1918 = vmatprep.subr.bf16.mxu0 %v1408
    %1919 = vmatpush1.bf16.msra.mxu0 %v1407
    %1920 = vmatprep.subr.bf16.mxu0 %v1402
    %1921 = vmatpush1.bf16.msra.mxu0 %v1401
    %1922 = vmatprep.subr.bf16.mxu0 %v1396
    %1923 = vmatpush1.bf16.msra.mxu0 %v1395
    %1924 = vmatprep.subr.bf16.mxu0 %v1390
    %1925 = vmatpush1.bf16.msra.mxu0 %v1389
    %1926 = vmatprep.subr.bf16.mxu0 %v1480
    %1927 = vmatpush2.bf16.msra.mxu0 %v1479
    %1928 = vmatprep.subr.bf16.mxu0 %v1474
    %1929 = vmatpush2.bf16.msra.mxu0 %v1473
    %1930 = vmatprep.subr.bf16.mxu0 %v1468
    %1931 = vmatpush2.bf16.msra.mxu0 %v1467
    %1932 = vmatprep.subr.bf16.mxu0 %v1462
    %1933 = vmatpush2.bf16.msra.mxu0 %v1461
    %1934 = vmatprep.subr.bf16.mxu0 %v1456
    %1935 = vmatpush2.bf16.msra.mxu0 %v1455
    %1936 = vmatprep.subr.bf16.mxu0 %v1450
    %1937 = vmatpush2.bf16.msra.mxu0 %v1449
    %1938 = vmatprep.subr.bf16.mxu0 %v1444
    %1939 = vmatpush2.bf16.msra.mxu0 %v1443
    %1940 = vmatprep.subr.bf16.mxu0 %v1438
    %1941 = vmatpush2.bf16.msra.mxu0 %v1437
    %1942 = vmatprep.mubr.bf16.mxu0 %v420
    %1943 = vmatmul.mubr.bf16.gmra.mxu0 %v419
    %v1944 = vpop.f32.mrf.mxu0
    %v1945 = vadd.f32 %v1904, %v1944
    %v1946 = vpop.f32.mrf.mxu0
    %v1947 = vadd.f32 %v1906, %v1946
    %v1948 = vpop.f32.mrf.mxu0
    %v1949 = vpop.f32.mrf.mxu0
    %1950 = vdwg.mxu0
    %1951 = vmatprep.subr.bf16.mxu0 %v1528
    %1952 = vmatpush1.bf16.msra.mxu0 %v1527
    %1953 = vmatprep.subr.bf16.mxu0 %v1522
    %1954 = vmatpush1.bf16.msra.mxu0 %v1521
    %1955 = vmatprep.subr.bf16.mxu0 %v1516
    %1956 = vmatpush1.bf16.msra.mxu0 %v1515
    %1957 = vmatprep.subr.bf16.mxu0 %v1510
    %1958 = vmatpush1.bf16.msra.mxu0 %v1509
    %1959 = vmatprep.subr.bf16.mxu0 %v1504
    %1960 = vmatpush1.bf16.msra.mxu0 %v1503
    %1961 = vmatprep.subr.bf16.mxu0 %v1498
    %1962 = vmatpush1.bf16.msra.mxu0 %v1497
    %1963 = vmatprep.subr.bf16.mxu0 %v1492
    %1964 = vmatpush1.bf16.msra.mxu0 %v1491
    %1965 = vmatprep.subr.bf16.mxu0 %v1486
    %1966 = vmatpush1.bf16.msra.mxu0 %v1485
    %1967 = vmatprep.subr.bf16.mxu0 %v1576
    %1968 = vmatpush2.bf16.msra.mxu0 %v1575
    %1969 = vmatprep.subr.bf16.mxu0 %v1570
    %1970 = vmatpush2.bf16.msra.mxu0 %v1569
    %1971 = vmatprep.subr.bf16.mxu0 %v1564
    %1972 = vmatpush2.bf16.msra.mxu0 %v1563
    %1973 = vmatprep.subr.bf16.mxu0 %v1558
    %1974 = vmatpush2.bf16.msra.mxu0 %v1557
    %1975 = vmatprep.subr.bf16.mxu0 %v1552
    %1976 = vmatpush2.bf16.msra.mxu0 %v1551
    %1977 = vmatprep.subr.bf16.mxu0 %v1546
    %1978 = vmatpush2.bf16.msra.mxu0 %v1545
    %1979 = vmatprep.subr.bf16.mxu0 %v1540
    %1980 = vmatpush2.bf16.msra.mxu0 %v1539
    %1981 = vmatprep.subr.bf16.mxu0 %v1534
    %1982 = vmatpush2.bf16.msra.mxu0 %v1533
    %1983 = vmatprep.mubr.bf16.mxu0 %v422
    %1984 = vmatmul.mubr.bf16.gmra.mxu0 %v421
    %v1985 = vpop.f32.mrf.mxu0
    %v1986 = vadd.f32 %v1945, %v1985
    %v1987 = vpop.f32.mrf.mxu0
    %v1988 = vadd.f32 %v1947, %v1987
    %v1989 = vpop.f32.mrf.mxu0
    %v1990 = vpop.f32.mrf.mxu0
    %1991 = vdwg.mxu0
    %1992 = vmatprep.subr.bf16.mxu0 %v1338
    %1993 = vmatpush1.bf16.msra.mxu0 %v1337
    %1994 = vmatprep.subr.bf16.mxu0 %v1332
    %1995 = vmatpush1.bf16.msra.mxu0 %v1331
    %1996 = vmatprep.subr.bf16.mxu0 %v1326
    %1997 = vmatpush1.bf16.msra.mxu0 %v1325
    %1998 = vmatprep.subr.bf16.mxu0 %v1320
    %1999 = vmatpush1.bf16.msra.mxu0 %v1319
    %2000 = vmatprep.subr.bf16.mxu0 %v1314
    %2001 = vmatpush1.bf16.msra.mxu0 %v1313
    %2002 = vmatprep.subr.bf16.mxu0 %v1308
    %2003 = vmatpush1.bf16.msra.mxu0 %v1307
    %2004 = vmatprep.subr.bf16.mxu0 %v1302
    %2005 = vmatpush1.bf16.msra.mxu0 %v1301
    %2006 = vmatprep.subr.bf16.mxu0 %v1296
    %2007 = vmatpush1.bf16.msra.mxu0 %v1295
    %2008 = vmatprep.subr.bf16.mxu0 %v1386
    %2009 = vmatpush2.bf16.msra.mxu0 %v1385
    %2010 = vmatprep.subr.bf16.mxu0 %v1380
    %2011 = vmatpush2.bf16.msra.mxu0 %v1379
    %2012 = vmatprep.subr.bf16.mxu0 %v1374
    %2013 = vmatpush2.bf16.msra.mxu0 %v1373
    %2014 = vmatprep.subr.bf16.mxu0 %v1368
    %2015 = vmatpush2.bf16.msra.mxu0 %v1367
    %2016 = vmatprep.subr.bf16.mxu0 %v1362
    %2017 = vmatpush2.bf16.msra.mxu0 %v1361
    %2018 = vmatprep.subr.bf16.mxu0 %v1356
    %2019 = vmatpush2.bf16.msra.mxu0 %v1355
    %2020 = vmatprep.subr.bf16.mxu0 %v1350
    %2021 = vmatpush2.bf16.msra.mxu0 %v1349
    %2022 = vmatprep.subr.bf16.mxu0 %v1344
    %2023 = vmatpush2.bf16.msra.mxu0 %v1343
    %2024 = vmatprep.mubr.bf16.mxu0 %v418
    %2025 = vmatmul.mubr.bf16.gmra.mxu0 %v417
    %v2026 = vpop.f32.mrf.mxu0
    %v2027 = vadd.f32 %v389, %v2026
    %v2028 = vpop.f32.mrf.mxu0
    %v2029 = vadd.f32 %v393, %v2028
    %v2030 = vpop.f32.mrf.mxu0
    %v2031 = vpop.f32.mrf.mxu0
    %2032 = vdwg.mxu0
    %2033 = vmatprep.subr.bf16.mxu0 %v1434
    %2034 = vmatpush1.bf16.msra.mxu0 %v1433
    %2035 = vmatprep.subr.bf16.mxu0 %v1428
    %2036 = vmatpush1.bf16.msra.mxu0 %v1427
    %2037 = vmatprep.subr.bf16.mxu0 %v1422
    %2038 = vmatpush1.bf16.msra.mxu0 %v1421
    %2039 = vmatprep.subr.bf16.mxu0 %v1416
    %2040 = vmatpush1.bf16.msra.mxu0 %v1415
    %2041 = vmatprep.subr.bf16.mxu0 %v1410
    %2042 = vmatpush1.bf16.msra.mxu0 %v1409
    %2043 = vmatprep.subr.bf16.mxu0 %v1404
    %2044 = vmatpush1.bf16.msra.mxu0 %v1403
    %2045 = vmatprep.subr.bf16.mxu0 %v1398
    %2046 = vmatpush1.bf16.msra.mxu0 %v1397
    %2047 = vmatprep.subr.bf16.mxu0 %v1392
    %2048 = vmatpush1.bf16.msra.mxu0 %v1391
    %2049 = vmatprep.subr.bf16.mxu0 %v1482
    %2050 = vmatpush2.bf16.msra.mxu0 %v1481
    %2051 = vmatprep.subr.bf16.mxu0 %v1476
    %2052 = vmatpush2.bf16.msra.mxu0 %v1475
    %2053 = vmatprep.subr.bf16.mxu0 %v1470
    %2054 = vmatpush2.bf16.msra.mxu0 %v1469
    %2055 = vmatprep.subr.bf16.mxu0 %v1464
    %2056 = vmatpush2.bf16.msra.mxu0 %v1463
    %2057 = vmatprep.subr.bf16.mxu0 %v1458
    %2058 = vmatpush2.bf16.msra.mxu0 %v1457
    %2059 = vmatprep.subr.bf16.mxu0 %v1452
    %2060 = vmatpush2.bf16.msra.mxu0 %v1451
    %2061 = vmatprep.subr.bf16.mxu0 %v1446
    %2062 = vmatpush2.bf16.msra.mxu0 %v1445
    %2063 = vmatprep.subr.bf16.mxu0 %v1440
    %2064 = vmatpush2.bf16.msra.mxu0 %v1439
    %2065 = vmatprep.mubr.bf16.mxu0 %v420
    %2066 = vmatmul.mubr.bf16.gmra.mxu0 %v419
    %v2067 = vpop.f32.mrf.mxu0
    %v2068 = vadd.f32 %v2027, %v2067
    %v2069 = vpop.f32.mrf.mxu0
    %v2070 = vadd.f32 %v2029, %v2069
    %v2071 = vpop.f32.mrf.mxu0
    %v2072 = vpop.f32.mrf.mxu0
    %2073 = vdwg.mxu0
    %2074 = vmatprep.subr.bf16.mxu0 %v1530
    %2075 = vmatpush1.bf16.msra.mxu0 %v1529
    %2076 = vmatprep.subr.bf16.mxu0 %v1524
    %2077 = vmatpush1.bf16.msra.mxu0 %v1523
    %2078 = vmatprep.subr.bf16.mxu0 %v1518
    %2079 = vmatpush1.bf16.msra.mxu0 %v1517
    %2080 = vmatprep.subr.bf16.mxu0 %v1512
    %2081 = vmatpush1.bf16.msra.mxu0 %v1511
    %2082 = vmatprep.subr.bf16.mxu0 %v1506
    %2083 = vmatpush1.bf16.msra.mxu0 %v1505
    %2084 = vmatprep.subr.bf16.mxu0 %v1500
    %2085 = vmatpush1.bf16.msra.mxu0 %v1499
    %2086 = vmatprep.subr.bf16.mxu0 %v1494
    %2087 = vmatpush1.bf16.msra.mxu0 %v1493
    %2088 = vmatprep.subr.bf16.mxu0 %v1488
    %2089 = vmatpush1.bf16.msra.mxu0 %v1487
    %2090 = vmatprep.subr.bf16.mxu0 %v1578
    %2091 = vmatpush2.bf16.msra.mxu0 %v1577
    %2092 = vmatprep.subr.bf16.mxu0 %v1572
    %2093 = vmatpush2.bf16.msra.mxu0 %v1571
    %2094 = vmatprep.subr.bf16.mxu0 %v1566
    %2095 = vmatpush2.bf16.msra.mxu0 %v1565
    %2096 = vmatprep.subr.bf16.mxu0 %v1560
    %2097 = vmatpush2.bf16.msra.mxu0 %v1559
    %2098 = vmatprep.subr.bf16.mxu0 %v1554
    %2099 = vmatpush2.bf16.msra.mxu0 %v1553
    %2100 = vmatprep.subr.bf16.mxu0 %v1548
    %2101 = vmatpush2.bf16.msra.mxu0 %v1547
    %2102 = vmatprep.subr.bf16.mxu0 %v1542
    %2103 = vmatpush2.bf16.msra.mxu0 %v1541
    %2104 = vmatprep.subr.bf16.mxu0 %v1536
    %2105 = vmatpush2.bf16.msra.mxu0 %v1535
    %2106 = vmatprep.mubr.bf16.mxu0 %v422
    %2107 = vmatmul.mubr.bf16.gmra.mxu0 %v421
    %v2108 = vpop.f32.mrf.mxu0
    %v2109 = vadd.f32 %v2068, %v2108
    %v2110 = vpop.f32.mrf.mxu0
    %v2111 = vadd.f32 %v2070, %v2110
    %v2112 = vpop.f32.mrf.mxu0
    %v2113 = vpop.f32.mrf.mxu0
    %2114 = vdwg.mxu0
    %2115 = vmatprep.subr.bf16.mxu0 %v1340
    %2116 = vmatpush1.bf16.msra.mxu0 %v1339
    %2117 = vmatprep.subr.bf16.mxu0 %v1334
    %2118 = vmatpush1.bf16.msra.mxu0 %v1333
    %2119 = vmatprep.subr.bf16.mxu0 %v1328
    %2120 = vmatpush1.bf16.msra.mxu0 %v1327
    %2121 = vmatprep.subr.bf16.mxu0 %v1322
    %2122 = vmatpush1.bf16.msra.mxu0 %v1321
    %2123 = vmatprep.subr.bf16.mxu0 %v1316
    %2124 = vmatpush1.bf16.msra.mxu0 %v1315
    %2125 = vmatprep.subr.bf16.mxu0 %v1310
    %2126 = vmatpush1.bf16.msra.mxu0 %v1309
    %2127 = vmatprep.subr.bf16.mxu0 %v1304
    %2128 = vmatpush1.bf16.msra.mxu0 %v1303
    %2129 = vmatprep.subr.bf16.mxu0 %v1298
    %2130 = vmatpush1.bf16.msra.mxu0 %v1297
    %2131 = vmatprep.subr.bf16.mxu0 %v1388
    %2132 = vmatpush2.bf16.msra.mxu0 %v1387
    %2133 = vmatprep.subr.bf16.mxu0 %v1382
    %2134 = vmatpush2.bf16.msra.mxu0 %v1381
    %2135 = vmatprep.subr.bf16.mxu0 %v1376
    %2136 = vmatpush2.bf16.msra.mxu0 %v1375
    %2137 = vmatprep.subr.bf16.mxu0 %v1370
    %2138 = vmatpush2.bf16.msra.mxu0 %v1369
    %2139 = vmatprep.subr.bf16.mxu0 %v1364
    %2140 = vmatpush2.bf16.msra.mxu0 %v1363
    %2141 = vmatprep.subr.bf16.mxu0 %v1358
    %2142 = vmatpush2.bf16.msra.mxu0 %v1357
    %2143 = vmatprep.subr.bf16.mxu0 %v1352
    %2144 = vmatpush2.bf16.msra.mxu0 %v1351
    %2145 = vmatprep.subr.bf16.mxu0 %v1346
    %2146 = vmatpush2.bf16.msra.mxu0 %v1345
    %2147 = vmatprep.mubr.bf16.mxu0 %v418
    %2148 = vmatmul.mubr.bf16.gmra.mxu0 %v417
    %v2149 = vpop.f32.mrf.mxu0
    %v2150 = vadd.f32 %v397, %v2149
    %v2151 = vpop.f32.mrf.mxu0
    %v2152 = vadd.f32 %v401, %v2151
    %v2153 = vpop.f32.mrf.mxu0
    %v2154 = vpop.f32.mrf.mxu0
    %2155 = vdwg.mxu0
    %2156 = vmatprep.subr.bf16.mxu0 %v1436
    %2157 = vmatpush1.bf16.msra.mxu0 %v1435
    %2158 = vmatprep.subr.bf16.mxu0 %v1430
    %2159 = vmatpush1.bf16.msra.mxu0 %v1429
    %2160 = vmatprep.subr.bf16.mxu0 %v1424
    %2161 = vmatpush1.bf16.msra.mxu0 %v1423
    %2162 = vmatprep.subr.bf16.mxu0 %v1418
    %2163 = vmatpush1.bf16.msra.mxu0 %v1417
    %2164 = vmatprep.subr.bf16.mxu0 %v1412
    %2165 = vmatpush1.bf16.msra.mxu0 %v1411
    %2166 = vmatprep.subr.bf16.mxu0 %v1406
    %2167 = vmatpush1.bf16.msra.mxu0 %v1405
    %2168 = vmatprep.subr.bf16.mxu0 %v1400
    %2169 = vmatpush1.bf16.msra.mxu0 %v1399
    %2170 = vmatprep.subr.bf16.mxu0 %v1394
    %2171 = vmatpush1.bf16.msra.mxu0 %v1393
    %2172 = vmatprep.subr.bf16.mxu0 %v1484
    %2173 = vmatpush2.bf16.msra.mxu0 %v1483
    %2174 = vmatprep.subr.bf16.mxu0 %v1478
    %2175 = vmatpush2.bf16.msra.mxu0 %v1477
    %2176 = vmatprep.subr.bf16.mxu0 %v1472
    %2177 = vmatpush2.bf16.msra.mxu0 %v1471
    %2178 = vmatprep.subr.bf16.mxu0 %v1466
    %2179 = vmatpush2.bf16.msra.mxu0 %v1465
    %2180 = vmatprep.subr.bf16.mxu0 %v1460
    %2181 = vmatpush2.bf16.msra.mxu0 %v1459
    %2182 = vmatprep.subr.bf16.mxu0 %v1454
    %2183 = vmatpush2.bf16.msra.mxu0 %v1453
    %2184 = vmatprep.subr.bf16.mxu0 %v1448
    %2185 = vmatpush2.bf16.msra.mxu0 %v1447
    %2186 = vmatprep.subr.bf16.mxu0 %v1442
    %2187 = vmatpush2.bf16.msra.mxu0 %v1441
    %2188 = vmatprep.mubr.bf16.mxu0 %v420
    %2189 = vmatmul.mubr.bf16.gmra.mxu0 %v419
    %v2190 = vpop.f32.mrf.mxu0
    %v2191 = vadd.f32 %v2150, %v2190
    %v2192 = vpop.f32.mrf.mxu0
    %v2193 = vadd.f32 %v2152, %v2192
    %v2194 = vpop.f32.mrf.mxu0
    %v2195 = vpop.f32.mrf.mxu0
    %2196 = vdwg.mxu0
    %2197 = vmatprep.subr.bf16.mxu0 %v1532
    %2198 = vmatpush1.bf16.msra.mxu0 %v1531
    %2199 = vmatprep.subr.bf16.mxu0 %v1526
    %2200 = vmatpush1.bf16.msra.mxu0 %v1525
    %2201 = vmatprep.subr.bf16.mxu0 %v1520
    %2202 = vmatpush1.bf16.msra.mxu0 %v1519
    %2203 = vmatprep.subr.bf16.mxu0 %v1514
    %2204 = vmatpush1.bf16.msra.mxu0 %v1513
    %2205 = vmatprep.subr.bf16.mxu0 %v1508
    %2206 = vmatpush1.bf16.msra.mxu0 %v1507
    %2207 = vmatprep.subr.bf16.mxu0 %v1502
    %2208 = vmatpush1.bf16.msra.mxu0 %v1501
    %2209 = vmatprep.subr.bf16.mxu0 %v1496
    %2210 = vmatpush1.bf16.msra.mxu0 %v1495
    %2211 = vmatprep.subr.bf16.mxu0 %v1490
    %2212 = vmatpush1.bf16.msra.mxu0 %v1489
    %2213 = vmatprep.subr.bf16.mxu0 %v1580
    %2214 = vmatpush2.bf16.msra.mxu0 %v1579
    %2215 = vmatprep.subr.bf16.mxu0 %v1574
    %2216 = vmatpush2.bf16.msra.mxu0 %v1573
    %2217 = vmatprep.subr.bf16.mxu0 %v1568
    %2218 = vmatpush2.bf16.msra.mxu0 %v1567
    %2219 = vmatprep.subr.bf16.mxu0 %v1562
    %2220 = vmatpush2.bf16.msra.mxu0 %v1561
    %2221 = vmatprep.subr.bf16.mxu0 %v1556
    %2222 = vmatpush2.bf16.msra.mxu0 %v1555
    %2223 = vmatprep.subr.bf16.mxu0 %v1550
    %2224 = vmatpush2.bf16.msra.mxu0 %v1549
    %2225 = vmatprep.subr.bf16.mxu0 %v1544
    %2226 = vmatpush2.bf16.msra.mxu0 %v1543
    %2227 = vmatprep.subr.bf16.mxu0 %v1538
    %2228 = vmatpush2.bf16.msra.mxu0 %v1537
    %2229 = vmatprep.mubr.bf16.mxu0 %v422
    %2230 = vmatmul.mubr.bf16.gmra.mxu0 %v421
    %v2231 = vpop.f32.mrf.mxu0
    %v2232 = vadd.f32 %v2191, %v2231
    %v2233 = vpop.f32.mrf.mxu0
    %v2234 = vadd.f32 %v2193, %v2233
    %v2235 = vpop.f32.mrf.mxu0
    %v2236 = vpop.f32.mrf.mxu0
    %2237 = vdwg.mxu0
    %v2238 = vtanh.pop %v1986
    %v2239 = vtanh.pop %v1988
    %v2240 = vtanh.pop %v2109
    %v2241 = vtanh.pop %v2111
    %v2242 = vtanh.pop %v2232
    %v2243 = vtanh.pop %v2234
    %v2244 = vmax.f32 %v2238, 0.0
    %v2245 = vmax.f32 %v2239, 0.0
    %v2246 = vmax.f32 %v2240, 0.0
    %v2247 = vmax.f32 %v2241, 0.0
    %v2248 = vmax.f32 %v2242, 0.0
    %v2249 = vmax.f32 %v2243, 0.0
    %v2250 = vld [vmem:[#allocation8] sm:$0xff]
    %v2251 = vld [vmem:[#allocation8 + $0x8] sm:$0xff]
    %v2252 = vld [vmem:[#allocation8 + $0x10] sm:$0xff]
    %v2253 = vld [vmem:[#allocation8 + $0x18] sm:$0xff]
    %v2254 = vld [vmem:[#allocation8 + $0x20] sm:$0xff]
    %v2255 = vld [vmem:[#allocation8 + $0x28] sm:$0xff]
    %v2256 = vmul.f32 %v2244, %v2250
    %v2257 = vmul.f32 %v2245, %v2251
    %v2258 = vmul.f32 %v2246, %v2252
    %v2259 = vmul.f32 %v2247, %v2253
    %v2260 = vmul.f32 %v2248, %v2254
    %v2261 = vmul.f32 %v2249, %v2255
    %v2262 = vpack.c.bf16 %v2256, %v2256
    %v2263 = vpack.c.bf16 %v2257, %v2257
    %v2264 = vpack.c.bf16 %v2258, %v2258
    %v2265 = vpack.c.bf16 %v2259, %v2259
    %v2266 = vpack.c.bf16 %v2260, %v2260
    %v2267 = vpack.c.bf16 %v2261, %v2261
    %v2268 = vld [vmem:[%s4] sm:$0xf]
    %v2269 = vld [vmem:[%s4 + $0x4] sm:$0xf]
    %v2270 = vld [vmem:[%s4 + $0x8] sm:$0xf]
    %v2271 = vld [vmem:[%s4 + $0xc] sm:$0xf]
    %v2272 = vld [vmem:[%s4 + $0x10] sm:$0xf]
    %v2273 = vld [vmem:[%s4 + $0x14] sm:$0xf]
    %v2274 = vld [vmem:[%s4 + $0x18] sm:$0xf]
    %v2275 = vld [vmem:[%s4 + $0x1c] sm:$0xf]
    %v2276 = vld [vmem:[%s4 + $0x20] sm:$0xf]
    %v2277 = vld [vmem:[%s4 + $0x24] sm:$0xf]
    %v2278 = vld [vmem:[%s4 + $0x28] sm:$0xf]
    %v2279 = vld [vmem:[%s4 + $0x2c] sm:$0xf]
    %v2280 = vld [vmem:[%s4 + $0x30] sm:$0xf]
    %v2281 = vld [vmem:[%s4 + $0x34] sm:$0xf]
    %v2282 = vld [vmem:[%s4 + $0x38] sm:$0xf]
    %v2283 = vld [vmem:[%s4 + $0x3c] sm:$0xf]
    %v2284 = vld [vmem:[%s4 + $0x40] sm:$0xf]
    %v2285 = vld [vmem:[%s4 + $0x44] sm:$0xf]
    %v2286 = vld [vmem:[%s4 + $0x48] sm:$0xf]
    %v2287 = vld [vmem:[%s4 + $0x4c] sm:$0xf]
    %v2288 = vld [vmem:[%s4 + $0x50] sm:$0xf]
    %v2289 = vld [vmem:[%s4 + $0x54] sm:$0xf]
    %v2290 = vld [vmem:[%s4 + $0x58] sm:$0xf]
    %v2291 = vld [vmem:[%s4 + $0x5c] sm:$0xf]
    %v2292 = vld [vmem:[%s4 + $0x60] sm:$0xf]
    %v2293 = vld [vmem:[%s4 + $0x64] sm:$0xf]
    %v2294 = vld [vmem:[%s4 + $0x68] sm:$0xf]
    %v2295 = vld [vmem:[%s4 + $0x6c] sm:$0xf]
    %v2296 = vld [vmem:[%s4 + $0x70] sm:$0xf]
    %v2297 = vld [vmem:[%s4 + $0x74] sm:$0xf]
    %v2298 = vld [vmem:[%s4 + $0x78] sm:$0xf]
    %v2299 = vld [vmem:[%s4 + $0x7c] sm:$0xf]
    %v2300 = vld [vmem:[%s4 + $0x80] sm:$0xf]
    %v2301 = vld [vmem:[%s4 + $0x84] sm:$0xf]
    %v2302 = vld [vmem:[%s4 + $0x88] sm:$0xf]
    %v2303 = vld [vmem:[%s4 + $0x8c] sm:$0xf]
    %v2304 = vld [vmem:[%s4 + $0x90] sm:$0xf]
    %v2305 = vld [vmem:[%s4 + $0x94] sm:$0xf]
    %v2306 = vld [vmem:[%s4 + $0x98] sm:$0xf]
    %v2307 = vld [vmem:[%s4 + $0x9c] sm:$0xf]
    %v2308 = vld [vmem:[%s4 + $0xa0] sm:$0xf]
    %v2309 = vld [vmem:[%s4 + $0xa4] sm:$0xf]
    %v2310 = vld [vmem:[%s4 + $0xa8] sm:$0xf]
    %v2311 = vld [vmem:[%s4 + $0xac] sm:$0xf]
    %v2312 = vld [vmem:[%s4 + $0xb0] sm:$0xf]
    %v2313 = vld [vmem:[%s4 + $0xb4] sm:$0xf]
    %v2314 = vld [vmem:[%s4 + $0xb8] sm:$0xf]
    %v2315 = vld [vmem:[%s4 + $0xbc] sm:$0xf]
    %v2316 = vld [vmem:[%s4 + $0xc0] sm:$0xf]
    %v2317 = vld [vmem:[%s4 + $0xc4] sm:$0xf]
    %v2318 = vld [vmem:[%s4 + $0xc8] sm:$0xf]
    %v2319 = vld [vmem:[%s4 + $0xcc] sm:$0xf]
    %v2320 = vld [vmem:[%s4 + $0xd0] sm:$0xf]
    %v2321 = vld [vmem:[%s4 + $0xd4] sm:$0xf]
    %v2322 = vld [vmem:[%s4 + $0xd8] sm:$0xf]
    %v2323 = vld [vmem:[%s4 + $0xdc] sm:$0xf]
    %v2324 = vld [vmem:[%s4 + $0xe0] sm:$0xf]
    %v2325 = vld [vmem:[%s4 + $0xe4] sm:$0xf]
    %v2326 = vld [vmem:[%s4 + $0xe8] sm:$0xf]
    %v2327 = vld [vmem:[%s4 + $0xec] sm:$0xf]
    %v2328 = vld [vmem:[%s4 + $0xf0] sm:$0xf]
    %v2329 = vld [vmem:[%s4 + $0xf4] sm:$0xf]
    %v2330 = vld [vmem:[%s4 + $0xf8] sm:$0xf]
    %v2331 = vld [vmem:[%s4 + $0xfc] sm:$0xf]
    %v2332 = vld [vmem:[%s4 + $0x100] sm:$0xf]
    %v2333 = vld [vmem:[%s4 + $0x104] sm:$0xf]
    %v2334 = vld [vmem:[%s4 + $0x108] sm:$0xf]
    %v2335 = vld [vmem:[%s4 + $0x10c] sm:$0xf]
    %v2336 = vld [vmem:[%s4 + $0x110] sm:$0xf]
    %v2337 = vld [vmem:[%s4 + $0x114] sm:$0xf]
    %v2338 = vld [vmem:[%s4 + $0x118] sm:$0xf]
    %v2339 = vld [vmem:[%s4 + $0x11c] sm:$0xf]
    %v2340 = vld [vmem:[%s4 + $0x120] sm:$0xf]
    %v2341 = vld [vmem:[%s4 + $0x124] sm:$0xf]
    %v2342 = vld [vmem:[%s4 + $0x128] sm:$0xf]
    %v2343 = vld [vmem:[%s4 + $0x12c] sm:$0xf]
    %v2344 = vld [vmem:[%s4 + $0x130] sm:$0xf]
    %v2345 = vld [vmem:[%s4 + $0x134] sm:$0xf]
    %v2346 = vld [vmem:[%s4 + $0x138] sm:$0xf]
    %v2347 = vld [vmem:[%s4 + $0x13c] sm:$0xf]
    %v2348 = vld [vmem:[%s4 + $0x140] sm:$0xf]
    %v2349 = vld [vmem:[%s4 + $0x144] sm:$0xf]
    %v2350 = vld [vmem:[%s4 + $0x148] sm:$0xf]
    %v2351 = vld [vmem:[%s4 + $0x14c] sm:$0xf]
    %v2352 = vld [vmem:[%s4 + $0x150] sm:$0xf]
    %v2353 = vld [vmem:[%s4 + $0x154] sm:$0xf]
    %v2354 = vld [vmem:[%s4 + $0x158] sm:$0xf]
    %v2355 = vld [vmem:[%s4 + $0x15c] sm:$0xf]
    %v2356 = vld [vmem:[%s4 + $0x160] sm:$0xf]
    %v2357 = vld [vmem:[%s4 + $0x164] sm:$0xf]
    %v2358 = vld [vmem:[%s4 + $0x168] sm:$0xf]
    %v2359 = vld [vmem:[%s4 + $0x16c] sm:$0xf]
    %v2360 = vld [vmem:[%s4 + $0x170] sm:$0xf]
    %v2361 = vld [vmem:[%s4 + $0x174] sm:$0xf]
    %v2362 = vld [vmem:[%s4 + $0x178] sm:$0xf]
    %v2363 = vld [vmem:[%s4 + $0x17c] sm:$0xf]
    %v2364 = vld [vmem:[#allocation10] sm:$0x1]
    %v2366 = vlaneseq
    %v2367 = vshrl.u32 %v2366, 7
    %v2368 = vsub.s32 0, %v2367
    %v2369 = vrot.slane %v2364, %v2368
    %v2467 = vunpack.c.l.b16 %v2268
    %v2468 = vunpack.c.l.b16 %v2269
    %v2469 = vunpack.c.l.b16 %v2270
    %v2470 = vunpack.c.l.b16 %v2271
    %v2471 = vunpack.c.l.b16 %v2272
    %v2472 = vunpack.c.l.b16 %v2273
    %v2473 = vunpack.c.l.b16 %v2274
    %v2474 = vunpack.c.l.b16 %v2275
    %v2475 = vunpack.c.l.b16 %v2276
    %v2476 = vunpack.c.l.b16 %v2277
    %v2477 = vunpack.c.l.b16 %v2278
    %v2478 = vunpack.c.l.b16 %v2279
    %v2479 = vunpack.c.l.b16 %v2280
    %v2480 = vunpack.c.l.b16 %v2281
    %v2481 = vunpack.c.l.b16 %v2282
    %v2482 = vunpack.c.l.b16 %v2283
    %v2483 = vunpack.c.l.b16 %v2284
    %v2484 = vunpack.c.l.b16 %v2285
    %v2485 = vunpack.c.l.b16 %v2286
    %v2486 = vunpack.c.l.b16 %v2287
    %v2487 = vunpack.c.l.b16 %v2288
    %v2488 = vunpack.c.l.b16 %v2289
    %v2489 = vunpack.c.l.b16 %v2290
    %v2490 = vunpack.c.l.b16 %v2291
    %v2491 = vunpack.c.l.b16 %v2292
    %v2492 = vunpack.c.l.b16 %v2293
    %v2493 = vunpack.c.l.b16 %v2294
    %v2494 = vunpack.c.l.b16 %v2295
    %v2495 = vunpack.c.l.b16 %v2296
    %v2496 = vunpack.c.l.b16 %v2297
    %v2497 = vunpack.c.l.b16 %v2298
    %v2498 = vunpack.c.l.b16 %v2299
    %v2499 = vunpack.c.l.b16 %v2300
    %v2500 = vunpack.c.l.b16 %v2301
    %v2501 = vunpack.c.l.b16 %v2302
    %v2502 = vunpack.c.l.b16 %v2303
    %v2503 = vunpack.c.l.b16 %v2304
    %v2504 = vunpack.c.l.b16 %v2305
    %v2505 = vunpack.c.l.b16 %v2306
    %v2506 = vunpack.c.l.b16 %v2307
    %v2507 = vunpack.c.l.b16 %v2308
    %v2508 = vunpack.c.l.b16 %v2309
    %v2509 = vunpack.c.l.b16 %v2310
    %v2510 = vunpack.c.l.b16 %v2311
    %v2511 = vunpack.c.l.b16 %v2312
    %v2512 = vunpack.c.l.b16 %v2313
    %v2513 = vunpack.c.l.b16 %v2314
    %v2514 = vunpack.c.l.b16 %v2315
    %v2515 = vunpack.c.l.b16 %v2316
    %v2516 = vunpack.c.l.b16 %v2317
    %v2517 = vunpack.c.l.b16 %v2318
    %v2518 = vunpack.c.l.b16 %v2319
    %v2519 = vunpack.c.l.b16 %v2320
    %v2520 = vunpack.c.l.b16 %v2321
    %v2521 = vunpack.c.l.b16 %v2322
    %v2522 = vunpack.c.l.b16 %v2323
    %v2523 = vunpack.c.l.b16 %v2324
    %v2524 = vunpack.c.l.b16 %v2325
    %v2525 = vunpack.c.l.b16 %v2326
    %v2526 = vunpack.c.l.b16 %v2327
    %v2527 = vunpack.c.l.b16 %v2328
    %v2528 = vunpack.c.l.b16 %v2329
    %v2529 = vunpack.c.l.b16 %v2330
    %v2530 = vunpack.c.l.b16 %v2331
    %v2531 = vunpack.c.l.b16 %v2332
    %v2532 = vunpack.c.l.b16 %v2333
    %v2533 = vunpack.c.l.b16 %v2334
    %v2534 = vunpack.c.l.b16 %v2335
    %v2535 = vunpack.c.l.b16 %v2336
    %v2536 = vunpack.c.l.b16 %v2337
    %v2537 = vunpack.c.l.b16 %v2338
    %v2538 = vunpack.c.l.b16 %v2339
    %v2539 = vunpack.c.l.b16 %v2340
    %v2540 = vunpack.c.l.b16 %v2341
    %v2541 = vunpack.c.l.b16 %v2342
    %v2542 = vunpack.c.l.b16 %v2343
    %v2543 = vunpack.c.l.b16 %v2344
    %v2544 = vunpack.c.l.b16 %v2345
    %v2545 = vunpack.c.l.b16 %v2346
    %v2546 = vunpack.c.l.b16 %v2347
    %v2547 = vunpack.c.l.b16 %v2348
    %v2548 = vunpack.c.l.b16 %v2349
    %v2549 = vunpack.c.l.b16 %v2350
    %v2550 = vunpack.c.l.b16 %v2351
    %v2551 = vunpack.c.l.b16 %v2352
    %v2552 = vunpack.c.l.b16 %v2353
    %v2553 = vunpack.c.l.b16 %v2354
    %v2554 = vunpack.c.l.b16 %v2355
    %v2555 = vunpack.c.l.b16 %v2356
    %v2556 = vunpack.c.l.b16 %v2357
    %v2557 = vunpack.c.l.b16 %v2358
    %v2558 = vunpack.c.l.b16 %v2359
    %v2559 = vunpack.c.l.b16 %v2360
    %v2560 = vunpack.c.l.b16 %v2361
    %v2561 = vunpack.c.l.b16 %v2362
    %v2562 = vunpack.c.l.b16 %v2363
    %v2563 = vpack.c.b16 %v2468, %v2467
    %v2564 = vpack.c.b16 %v2470, %v2469
    %v2565 = vpack.c.b16 %v2472, %v2471
    %v2566 = vpack.c.b16 %v2474, %v2473
    %v2567 = vpack.c.b16 %v2476, %v2475
    %v2568 = vpack.c.b16 %v2478, %v2477
    %v2569 = vpack.c.b16 %v2480, %v2479
    %v2570 = vpack.c.b16 %v2482, %v2481
    %v2571 = vpack.c.b16 %v2484, %v2483
    %v2572 = vpack.c.b16 %v2486, %v2485
    %v2573 = vpack.c.b16 %v2488, %v2487
    %v2574 = vpack.c.b16 %v2490, %v2489
    %v2575 = vpack.c.b16 %v2492, %v2491
    %v2576 = vpack.c.b16 %v2494, %v2493
    %v2577 = vpack.c.b16 %v2496, %v2495
    %v2578 = vpack.c.b16 %v2498, %v2497
    %v2579 = vpack.c.b16 %v2500, %v2499
    %v2580 = vpack.c.b16 %v2502, %v2501
    %v2581 = vpack.c.b16 %v2504, %v2503
    %v2582 = vpack.c.b16 %v2506, %v2505
    %v2583 = vpack.c.b16 %v2508, %v2507
    %v2584 = vpack.c.b16 %v2510, %v2509
    %v2585 = vpack.c.b16 %v2512, %v2511
    %v2586 = vpack.c.b16 %v2514, %v2513
    %v2587 = vpack.c.b16 %v2516, %v2515
    %v2588 = vpack.c.b16 %v2518, %v2517
    %v2589 = vpack.c.b16 %v2520, %v2519
    %v2590 = vpack.c.b16 %v2522, %v2521
    %v2591 = vpack.c.b16 %v2524, %v2523
    %v2592 = vpack.c.b16 %v2526, %v2525
    %v2593 = vpack.c.b16 %v2528, %v2527
    %v2594 = vpack.c.b16 %v2530, %v2529
    %v2595 = vpack.c.b16 %v2532, %v2531
    %v2596 = vpack.c.b16 %v2534, %v2533
    %v2597 = vpack.c.b16 %v2536, %v2535
    %v2598 = vpack.c.b16 %v2538, %v2537
    %v2599 = vpack.c.b16 %v2540, %v2539
    %v2600 = vpack.c.b16 %v2542, %v2541
    %v2601 = vpack.c.b16 %v2544, %v2543
    %v2602 = vpack.c.b16 %v2546, %v2545
    %v2603 = vpack.c.b16 %v2548, %v2547
    %v2604 = vpack.c.b16 %v2550, %v2549
    %v2605 = vpack.c.b16 %v2552, %v2551
    %v2606 = vpack.c.b16 %v2554, %v2553
    %v2607 = vpack.c.b16 %v2556, %v2555
    %v2608 = vpack.c.b16 %v2558, %v2557
    %v2609 = vpack.c.b16 %v2560, %v2559
    %v2610 = vpack.c.b16 %v2562, %v2561
    %2659 = vmatprep.subr.bf16.mxu0 0
    %2660 = vmatpush1.bf16.msra.mxu0 %v2570
    %2661 = vmatprep.subr.bf16.mxu0 0
    %2662 = vmatpush1.bf16.msra.mxu0 %v2569
    %2663 = vmatprep.subr.bf16.mxu0 0
    %2664 = vmatpush1.bf16.msra.mxu0 %v2568
    %2665 = vmatprep.subr.bf16.mxu0 0
    %2666 = vmatpush1.bf16.msra.mxu0 %v2567
    %2667 = vmatprep.subr.bf16.mxu0 0
    %2668 = vmatpush1.bf16.msra.mxu0 %v2566
    %2669 = vmatprep.subr.bf16.mxu0 0
    %2670 = vmatpush1.bf16.msra.mxu0 %v2565
    %2671 = vmatprep.subr.bf16.mxu0 0
    %2672 = vmatpush1.bf16.msra.mxu0 %v2564
    %2673 = vmatprep.subr.bf16.mxu0 0
    %2674 = vmatpush1.bf16.msra.mxu0 %v2563
    %2675 = vmatprep.subr.bf16.mxu0 0
    %2676 = vmatpush2.bf16.msra.mxu0 %v2578
    %2677 = vmatprep.subr.bf16.mxu0 0
    %2678 = vmatpush2.bf16.msra.mxu0 %v2577
    %2679 = vmatprep.subr.bf16.mxu0 0
    %2680 = vmatpush2.bf16.msra.mxu0 %v2576
    %2681 = vmatprep.subr.bf16.mxu0 0
    %2682 = vmatpush2.bf16.msra.mxu0 %v2575
    %2683 = vmatprep.subr.bf16.mxu0 0
    %2684 = vmatpush2.bf16.msra.mxu0 %v2574
    %2685 = vmatprep.subr.bf16.mxu0 0
    %2686 = vmatpush2.bf16.msra.mxu0 %v2573
    %2687 = vmatprep.subr.bf16.mxu0 0
    %2688 = vmatpush2.bf16.msra.mxu0 %v2572
    %2689 = vmatprep.subr.bf16.mxu0 0
    %2690 = vmatpush2.bf16.msra.mxu0 %v2571
    %2691 = vmatprep.mubr.bf16.mxu0 %v2263
    %2692 = vmatmul.mubr.bf16.gmra.mxu0 %v2262
    %v2693 = vpop.f32.mrf.mxu0
    %v2694 = vadd.f32 %v2369, %v2693
    %v2695 = vpop.f32.mrf.mxu0
    %v2696 = vpop.f32.mrf.mxu0
    %v2697 = vpop.f32.mrf.mxu0
    %2698 = vdwg.mxu0
    %2699 = vmatprep.subr.bf16.mxu0 0
    %2700 = vmatpush1.bf16.msra.mxu0 %v2586
    %2701 = vmatprep.subr.bf16.mxu0 0
    %2702 = vmatpush1.bf16.msra.mxu0 %v2585
    %2703 = vmatprep.subr.bf16.mxu0 0
    %2704 = vmatpush1.bf16.msra.mxu0 %v2584
    %2705 = vmatprep.subr.bf16.mxu0 0
    %2706 = vmatpush1.bf16.msra.mxu0 %v2583
    %2707 = vmatprep.subr.bf16.mxu0 0
    %2708 = vmatpush1.bf16.msra.mxu0 %v2582
    %2709 = vmatprep.subr.bf16.mxu0 0
    %2710 = vmatpush1.bf16.msra.mxu0 %v2581
    %2711 = vmatprep.subr.bf16.mxu0 0
    %2712 = vmatpush1.bf16.msra.mxu0 %v2580
    %2713 = vmatprep.subr.bf16.mxu0 0
    %2714 = vmatpush1.bf16.msra.mxu0 %v2579
    %2715 = vmatprep.subr.bf16.mxu0 0
    %2716 = vmatpush2.bf16.msra.mxu0 %v2594
    %2717 = vmatprep.subr.bf16.mxu0 0
    %2718 = vmatpush2.bf16.msra.mxu0 %v2593
    %2719 = vmatprep.subr.bf16.mxu0 0
    %2720 = vmatpush2.bf16.msra.mxu0 %v2592
    %2721 = vmatprep.subr.bf16.mxu0 0
    %2722 = vmatpush2.bf16.msra.mxu0 %v2591
    %2723 = vmatprep.subr.bf16.mxu0 0
    %2724 = vmatpush2.bf16.msra.mxu0 %v2590
    %2725 = vmatprep.subr.bf16.mxu0 0
    %2726 = vmatpush2.bf16.msra.mxu0 %v2589
    %2727 = vmatprep.subr.bf16.mxu0 0
    %2728 = vmatpush2.bf16.msra.mxu0 %v2588
    %2729 = vmatprep.subr.bf16.mxu0 0
    %2730 = vmatpush2.bf16.msra.mxu0 %v2587
    %2731 = vmatprep.mubr.bf16.mxu0 %v2265
    %2732 = vmatmul.mubr.bf16.gmra.mxu0 %v2264
    %v2733 = vpop.f32.mrf.mxu0
    %v2734 = vadd.f32 %v2694, %v2733
    %v2735 = vpop.f32.mrf.mxu0
    %v2736 = vpop.f32.mrf.mxu0
    %v2737 = vpop.f32.mrf.mxu0
    %2738 = vdwg.mxu0
    %2739 = vmatprep.subr.bf16.mxu0 0
    %2740 = vmatpush1.bf16.msra.mxu0 %v2602
    %2741 = vmatprep.subr.bf16.mxu0 0
    %2742 = vmatpush1.bf16.msra.mxu0 %v2601
    %2743 = vmatprep.subr.bf16.mxu0 0
    %2744 = vmatpush1.bf16.msra.mxu0 %v2600
    %2745 = vmatprep.subr.bf16.mxu0 0
    %2746 = vmatpush1.bf16.msra.mxu0 %v2599
    %2747 = vmatprep.subr.bf16.mxu0 0
    %2748 = vmatpush1.bf16.msra.mxu0 %v2598
    %2749 = vmatprep.subr.bf16.mxu0 0
    %2750 = vmatpush1.bf16.msra.mxu0 %v2597
    %2751 = vmatprep.subr.bf16.mxu0 0
    %2752 = vmatpush1.bf16.msra.mxu0 %v2596
    %2753 = vmatprep.subr.bf16.mxu0 0
    %2754 = vmatpush1.bf16.msra.mxu0 %v2595
    %2755 = vmatprep.subr.bf16.mxu0 0
    %2756 = vmatpush2.bf16.msra.mxu0 %v2610
    %2757 = vmatprep.subr.bf16.mxu0 0
    %2758 = vmatpush2.bf16.msra.mxu0 %v2609
    %2759 = vmatprep.subr.bf16.mxu0 0
    %2760 = vmatpush2.bf16.msra.mxu0 %v2608
    %2761 = vmatprep.subr.bf16.mxu0 0
    %2762 = vmatpush2.bf16.msra.mxu0 %v2607
    %2763 = vmatprep.subr.bf16.mxu0 0
    %2764 = vmatpush2.bf16.msra.mxu0 %v2606
    %2765 = vmatprep.subr.bf16.mxu0 0
    %2766 = vmatpush2.bf16.msra.mxu0 %v2605
    %2767 = vmatprep.subr.bf16.mxu0 0
    %2768 = vmatpush2.bf16.msra.mxu0 %v2604
    %2769 = vmatprep.subr.bf16.mxu0 0
    %2770 = vmatpush2.bf16.msra.mxu0 %v2603
    %2771 = vmatprep.mubr.bf16.mxu0 %v2267
    %2772 = vmatmul.mubr.bf16.gmra.mxu0 %v2266
    %v2773 = vpop.f32.mrf.mxu0
    %v2774 = vadd.f32 %v2734, %v2773
    %v2775 = vpop.f32.mrf.mxu0
    %v2776 = vpop.f32.mrf.mxu0
    %v2777 = vpop.f32.mrf.mxu0
    %2778 = vdwg.mxu0
    %vm2779 = vcmask 64512
    %v2780 = vsel %vm2779, %v2774, -inf
    %2781 = vmax.xlane.f32.xlu0 %v2780
    %v2782 = vpop.xlane.xlu0 %2781
    %v2783 = vsub.f32 %v2774, %v2782
    %v2784 = vmul.f32 %v2783, 1.442695
    %v2785 = vpow.pop %v2784
    %v2786 = vsel %vm2779, %v2785, 0.0
    %2787 = vadd.xlane.f32.xlu0 %v2786
    %v2788 = vpop.xlane.xlu0 %2787
    %v2789 = vrcp.pop %v2788
    %v2790 = vmul.f32 %v2785, %v2789
    %2791 = vst.msk [vmem:[#allocation11] sm:$0xff] %vm2779, %v2790
    // Predicated region
    $region46: #{tpu_custom_call.1} parent=1 // pred_check
      _
    $region47: #{tpu_custom_call.1} parent=1 // pred_check_branch
      %2793 = sbr.rel (0) target = $region49
    $region48: #{tpu_custom_call.1} parent=1 // pred_region
      %s2795 = ssub.s32 128, 128
      %2796 = vsyncadd [#allocation4], %s2795
      %s2798 = sshll.u32 [#allocation11], 4
      %s2799 = int_to_ptr.vmem [resolvable:$true] %s2798
      %2801 = dma.vmem_to_hbm [thread:$0]  %s2799, 128, %s6, [#allocation4]
    $region49: #{tpu_custom_call.1} parent=1 // pred_fallthru
      _
    // Predicated region
    $region50: #{tpu_custom_call.1} parent=1 // pred_check
      _
    $region51: #{tpu_custom_call.1} parent=1 // pred_check_branch
      %2803 = sbr.rel (0) target = $region53
    $region52: #{tpu_custom_call.1} parent=1 // pred_region
      %2804 = dma.done [#allocation4], 128
    $region53: #{tpu_custom_call.1} parent=1 // pred_fallthru
      _
    %2805 = vsyncpa [#allocation3], 1
    %2806 = vsyncpa [#allocation6], 1
    %2807 = vsyncpa [#allocation9], 1
    %2808 = vsyncpa [#allocation4], 1

</llo_original>
